<compile_context>
chip_gen: v6e
topology: v6e:2x2x1
jax: 0.10.0
libtpu: 0.0.40
codegen_flags: <defaults>
</compile_context>

<pallas_src>
import functools

import jax
import jax.numpy as jnp
from jax import lax
from jax.experimental import pallas as pl
from jax.experimental.pallas import tpu as pltpu


def _flat_shift(a, off, length):
    """Return t with t[:, s] = a[:, (s + off) % length] (wrap is masked by caller)."""
    i = off % length
    if i == 0:
        return a
    return jnp.concatenate([a[:, i:], a[:, :i]], axis=1)


# -------- fused GroupNorm + Swish + 3x3x3 Conv3d kernel (one batch element) --------
def _block_kernel(x_ref, g_ref, be_ref, w_ref, bias_ref, mask_ref, o_ref,
                  *, dims, groups, eps, mxu_dtype):
    D, H, W = dims
    S = D * H * W
    C = x_ref.shape[1]
    cg = C // groups
    inv_n = 1.0 / float(cg * S)

    x = x_ref[0].astype(jnp.float32)                        # (C, S), lane-dense

    # ---- GroupNorm stats: lane reduce -> tiny per-group segment sums (no MXU) ----
    def group_combine(col):                                  # (C, 1) -> per-channel group sums
        parts = []
        for g in range(groups):
            seg = jnp.sum(col[g * cg:(g + 1) * cg, :], axis=0, keepdims=True)
            parts.append(jnp.broadcast_to(seg, (cg, 1)))
        return jnp.concatenate(parts, axis=0)                # (C, 1)

    ch_sum = jnp.sum(x, axis=1, keepdims=True)               # (C, 1)
    mean = group_combine(ch_sum) * inv_n
    xc = x - mean
    ch_css = jnp.sum(xc * xc, axis=1, keepdims=True)         # centered sum of squares
    var = group_combine(ch_css) * inv_n
    y = xc * lax.rsqrt(var + eps) * g_ref[...] + be_ref[...]
    a = y * jax.nn.sigmoid(y)                                # Swish (f32 VPU + EUP)
    # Dropout(p=0) == Identity in the reference module: nothing to do.

    a16 = a.astype(mxu_dtype)                                # single early cast, (C, S)

    # ---- 3x3x3 conv: 27 lane-shifted + boundary-masked bf16 taps,
    #      3 grouped MXU matmuls (K = 9*C), f32 accumulation ----
    acc = None
    for kd in range(3):
        taps = []
        for kh in range(3):
            for kw in range(3):
                off = (kd - 1) * H * W + (kh - 1) * W + (kw - 1)
                t = _flat_shift(a16, off, S)
                ti = kd * 9 + kh * 3 + kw
                taps.append(t * mask_ref[ti:ti + 1, :])      # zero out-of-volume lanes
        patch = jnp.concatenate(taps, axis=0)                # (9*C, S), mxu_dtype
        part = jnp.dot(w_ref[kd], patch,
                       preferred_element_type=jnp.float32)   # (Cout, S), f32
        acc = part if acc is None else acc + part
    o_ref[0] = (acc + bias_ref[...]).astype(o_ref.dtype)


def _vmem_limit_bytes(C, Cout, S, in_itemsize, out_itemsize):
    f32, b16 = 4, 2
    io = 2 * (C * S * in_itemsize + Cout * S * out_itemsize)      # double-buffered blocks
    consts = 27 * C * Cout * b16 + 27 * S * b16 + (2 * C + Cout) * 128 * f32
    work = (6 * C * S * f32             # f32 GroupNorm / Swish temporaries
            + C * S * b16               # cast activation
            + 2 * 9 * C * S * b16       # shifted taps + concatenated patch group
            + 2 * Cout * S * f32)       # conv accumulator + partial product
    need = io + consts + work
    return int(min(max(2 * need, 32 * 1024 * 1024), 64 * 1024 * 1024))


# -------- wrapper (PyTorch NCDHW in / NCDHW out, no activation transposes) --------
def block_forward(x_ncdhw, params, groups, eps=1e-5, mxu_dtype=jnp.bfloat16):
    """GroupNorm(groups, C) -> Swish -> Conv3d(C, Cout, 3, padding=1)."""
    B, C, D, H, W = x_ncdhw.shape
    assert C % groups == 0
    S = D * H * W
    # TODO(synk): pad S to a multiple of 128 for odd volumes instead of asserting.
    assert S % 128 == 0, "flattened spatial dim must be lane-aligned"
    wc = params["conv_w"]                                    # (Cout, Cin, 3, 3, 3)
    Cout = wc.shape[0]

    # XLA-side glue (channels-first (C, S) == native NCDHW memory order).
    x = x_ncdhw.reshape(B, C, S)
    gamma = params["gn_w"].reshape(C, 1).astype(jnp.float32)
    beta = params["gn_b"].reshape(C, 1).astype(jnp.float32)
    # (Cout,Cin,kd,kh,kw) -> (kd, Cout, kh, kw, Cin) -> (3, Cout, 9*Cin); bf16 MXU operand.
    w = jnp.transpose(wc, (2, 0, 3, 4, 1)).reshape(3, Cout, 9 * C).astype(mxu_dtype)
    bias = params["conv_b"].reshape(Cout, 1).astype(jnp.float32)

    # Boundary masks for the 27 taps over the flattened spatial axis (built once).
    def axis_valid(n, k):
        i = jnp.arange(n, dtype=jnp.int32) + (k - 1)
        return (i >= 0) & (i < n)
    mask_rows = []
    for kd in range(3):
        vd = axis_valid(D, kd)
        for kh in range(3):
            vh = axis_valid(H, kh)
            for kw in range(3):
                vw = axis_valid(W, kw)
                m = vd[:, None, None] & vh[None, :, None] & vw[None, None, :]
                mask_rows.append(m.reshape(S))
    mask = jnp.stack(mask_rows, axis=0).astype(mxu_dtype)    # (27, S)

    kernel = functools.partial(_block_kernel, dims=(D, H, W), groups=groups,
                               eps=eps, mxu_dtype=mxu_dtype)
    out = pl.pallas_call(
        kernel,
        out_shape=jax.ShapeDtypeStruct((B, Cout, S), x_ncdhw.dtype),
        grid=(B,),
        in_specs=[pl.BlockSpec((1, C, S), lambda b: (b, 0, 0)),
                  pl.BlockSpec((C, 1), lambda b: (0, 0)),
                  pl.BlockSpec((C, 1), lambda b: (0, 0)),
                  pl.BlockSpec((3, Cout, 9 * C), lambda b: (0, 0, 0)),
                  pl.BlockSpec((Cout, 1), lambda b: (0, 0)),
                  pl.BlockSpec((27, S), lambda b: (0, 0))],
        out_specs=pl.BlockSpec((1, Cout, S), lambda b: (b, 0, 0)),
        compiler_params=pltpu.CompilerParams(
            dimension_semantics=("parallel",),
            vmem_limit_bytes=_vmem_limit_bytes(
                C, Cout, S, x.dtype.itemsize, x_ncdhw.dtype.itemsize)),
    )(x, gamma, beta, w, bias, mask)

    return out.reshape(B, Cout, D, H, W)


# -------- pure-JAX reference (matches the kernel's bf16 MXU path) --------
def _ref_block(x_ncdhw, params, groups, eps=1e-5, mxu_dtype=jnp.bfloat16):
    B, C, D, H, W = x_ncdhw.shape
    x = x_ncdhw.astype(jnp.float32)
    xg = x.reshape(B, groups, C // groups, D, H, W)
    mean = xg.mean(axis=(2, 3, 4, 5), keepdims=True)
    var = ((xg - mean) ** 2).mean(axis=(2, 3, 4, 5), keepdims=True)
    y = ((xg - mean) * lax.rsqrt(var + eps)).reshape(B, C, D, H, W)
    y = y * params["gn_w"].reshape(1, C, 1, 1, 1) + params["gn_b"].reshape(1, C, 1, 1, 1)
    a = (y * jax.nn.sigmoid(y)).astype(mxu_dtype)
    out = lax.conv_general_dilated(
        a, params["conv_w"].astype(mxu_dtype),
        window_strides=(1, 1, 1), padding=[(1, 1)] * 3,
        dimension_numbers=("NCDHW", "OIDHW", "NCDHW"),
        preferred_element_type=jnp.float32)
    return out + params["conv_b"].reshape(1, -1, 1, 1, 1)


if __name__ == "__main__":
    B, C, Cout, D, H, W, groups = 2, 16, 32, 4, 8, 8, 4

    key = jax.random.PRNGKey(0)
    keys = jax.random.split(key, 5)
    x = jax.random.normal(keys[0], (B, C, D, H, W), jnp.float32)
    params = dict(
        gn_w=1.0 + 0.1 * jax.random.normal(keys[1], (C,), jnp.float32),
        gn_b=0.1 * jax.random.normal(keys[2], (C,), jnp.float32),
        conv_w=0.1 * jax.random.normal(keys[3], (Cout, C, 3, 3, 3), jnp.float32),
        conv_b=0.05 * jax.random.normal(keys[4], (Cout,), jnp.float32),
    )

    fwd = jax.jit(functools.partial(block_forward, groups=groups))
    out = jax.block_until_ready(fwd(x, params))

    ref = _ref_block(x, params, groups)
    assert out.shape == (B, Cout, D, H, W)
    max_err = float(jnp.max(jnp.abs(out - ref)))
    assert jnp.allclose(out, ref, rtol=2e-2, atol=2e-2), max_err
    print("KERNEL_OK")
</pallas_src>

<mosaic_0001>
module attributes {stable_mosaic.version = 11 : i64} {
  func.func @_block_kernel(%arg0: i32, %arg1: memref<1x16x256xf32, #tpu.memory_space<vmem>>, %arg2: memref<16x1xf32, #tpu.memory_space<vmem>>, %arg3: memref<16x1xf32, #tpu.memory_space<vmem>>, %arg4: memref<3x32x144xbf16, #tpu.memory_space<vmem>>, %arg5: memref<32x1xf32, #tpu.memory_space<vmem>>, %arg6: memref<27x256xbf16, #tpu.memory_space<vmem>>, %arg7: memref<1x32x256xf32, #tpu.memory_space<vmem>>) attributes {dimension_semantics = [#tpu.dimension_semantics<parallel>], iteration_bounds = array<i64: 2>, scalar_prefetch = 0 : i64, scratch_operands = 0 : i64, tpu.core_type = #tpu.core_type<tc>, window_params = [{transform_indices = @transform_0, window_bounds = array<i64: 1, 16, 256>}, {pipeline_mode = #tpu.pipeline_mode<synchronous>, transform_indices = @transform_1, window_bounds = array<i64: 16, 1>}, {pipeline_mode = #tpu.pipeline_mode<synchronous>, transform_indices = @transform_2, window_bounds = array<i64: 16, 1>}, {pipeline_mode = #tpu.pipeline_mode<synchronous>, transform_indices = @transform_3, window_bounds = array<i64: 3, 32, 144>}, {pipeline_mode = #tpu.pipeline_mode<synchronous>, transform_indices = @transform_4, window_bounds = array<i64: 32, 1>}, {pipeline_mode = #tpu.pipeline_mode<synchronous>, transform_indices = @transform_5, window_bounds = array<i64: 27, 256>}, {transform_indices = @transform_6, window_bounds = array<i64: 1, 32, 256>}]} {
    %c0 = arith.constant 0 : index
    %c0_0 = arith.constant 0 : index
    %c0_1 = arith.constant 0 : index
    %0 = vector.load %arg1[%c0, %c0_0, %c0_1] : memref<1x16x256xf32, #tpu.memory_space<vmem>>, vector<1x16x256xf32>
    %1 = vector.shape_cast %0 : vector<1x16x256xf32> to vector<16x256xf32>
    %cst = arith.constant dense<0.000000e+00> : vector<16xf32>
    %2 = vector.multi_reduction <add>, %1, %cst [1] : vector<16x256xf32> to vector<16xf32>
    %3 = vector.shape_cast %2 : vector<16xf32> to vector<16x1xf32>
    %4 = vector.extract_strided_slice %3 {offsets = [0, 0], sizes = [4, 1], strides = [1, 1]} : vector<16x1xf32> to vector<4x1xf32>
    %cst_2 = arith.constant dense<0.000000e+00> : vector<1xf32>
    %5 = vector.multi_reduction <add>, %4, %cst_2 [0] : vector<4x1xf32> to vector<1xf32>
    %6 = vector.shape_cast %5 : vector<1xf32> to vector<1x1xf32>
    %7 = vector.shape_cast %6 : vector<1x1xf32> to vector<1x1xf32>
    %8 = vector.broadcast %7 : vector<1x1xf32> to vector<4x1xf32>
    %9 = vector.extract_strided_slice %3 {offsets = [4, 0], sizes = [4, 1], strides = [1, 1]} : vector<16x1xf32> to vector<4x1xf32>
    %cst_3 = arith.constant dense<0.000000e+00> : vector<1xf32>
    %10 = vector.multi_reduction <add>, %9, %cst_3 [0] : vector<4x1xf32> to vector<1xf32>
    %11 = vector.shape_cast %10 : vector<1xf32> to vector<1x1xf32>
    %12 = vector.shape_cast %11 : vector<1x1xf32> to vector<1x1xf32>
    %13 = vector.broadcast %12 : vector<1x1xf32> to vector<4x1xf32>
    %14 = vector.extract_strided_slice %3 {offsets = [8, 0], sizes = [4, 1], strides = [1, 1]} : vector<16x1xf32> to vector<4x1xf32>
    %cst_4 = arith.constant dense<0.000000e+00> : vector<1xf32>
    %15 = vector.multi_reduction <add>, %14, %cst_4 [0] : vector<4x1xf32> to vector<1xf32>
    %16 = vector.shape_cast %15 : vector<1xf32> to vector<1x1xf32>
    %17 = vector.shape_cast %16 : vector<1x1xf32> to vector<1x1xf32>
    %18 = vector.broadcast %17 : vector<1x1xf32> to vector<4x1xf32>
    %19 = vector.extract_strided_slice %3 {offsets = [12, 0], sizes = [4, 1], strides = [1, 1]} : vector<16x1xf32> to vector<4x1xf32>
    %cst_5 = arith.constant dense<0.000000e+00> : vector<1xf32>
    %20 = vector.multi_reduction <add>, %19, %cst_5 [0] : vector<4x1xf32> to vector<1xf32>
    %21 = vector.shape_cast %20 : vector<1xf32> to vector<1x1xf32>
    %22 = vector.shape_cast %21 : vector<1x1xf32> to vector<1x1xf32>
    %23 = vector.broadcast %22 : vector<1x1xf32> to vector<4x1xf32>
    %24 = tpu.concatenate %8, %13, %18, %23 in 0 : vector<4x1xf32>, vector<4x1xf32>, vector<4x1xf32>, vector<4x1xf32> -> vector<16x1xf32>
    %cst_6 = arith.constant 9.765625E-4 : f32
    %25 = vector.broadcast %cst_6 : f32 to vector<16x1xf32>
    %26 = arith.mulf %24, %25 : vector<16x1xf32>
    %27 = vector.broadcast %26 : vector<16x1xf32> to vector<16x256xf32>
    %28 = arith.subf %1, %27 : vector<16x256xf32>
    %29 = arith.mulf %28, %28 : vector<16x256xf32>
    %cst_7 = arith.constant dense<0.000000e+00> : vector<16xf32>
    %30 = vector.multi_reduction <add>, %29, %cst_7 [1] : vector<16x256xf32> to vector<16xf32>
    %31 = vector.shape_cast %30 : vector<16xf32> to vector<16x1xf32>
    %32 = vector.extract_strided_slice %31 {offsets = [0, 0], sizes = [4, 1], strides = [1, 1]} : vector<16x1xf32> to vector<4x1xf32>
    %cst_8 = arith.constant dense<0.000000e+00> : vector<1xf32>
    %33 = vector.multi_reduction <add>, %32, %cst_8 [0] : vector<4x1xf32> to vector<1xf32>
    %34 = vector.shape_cast %33 : vector<1xf32> to vector<1x1xf32>
    %35 = vector.shape_cast %34 : vector<1x1xf32> to vector<1x1xf32>
    %36 = vector.broadcast %35 : vector<1x1xf32> to vector<4x1xf32>
    %37 = vector.extract_strided_slice %31 {offsets = [4, 0], sizes = [4, 1], strides = [1, 1]} : vector<16x1xf32> to vector<4x1xf32>
    %cst_9 = arith.constant dense<0.000000e+00> : vector<1xf32>
    %38 = vector.multi_reduction <add>, %37, %cst_9 [0] : vector<4x1xf32> to vector<1xf32>
    %39 = vector.shape_cast %38 : vector<1xf32> to vector<1x1xf32>
    %40 = vector.shape_cast %39 : vector<1x1xf32> to vector<1x1xf32>
    %41 = vector.broadcast %40 : vector<1x1xf32> to vector<4x1xf32>
    %42 = vector.extract_strided_slice %31 {offsets = [8, 0], sizes = [4, 1], strides = [1, 1]} : vector<16x1xf32> to vector<4x1xf32>
    %cst_10 = arith.constant dense<0.000000e+00> : vector<1xf32>
    %43 = vector.multi_reduction <add>, %42, %cst_10 [0] : vector<4x1xf32> to vector<1xf32>
    %44 = vector.shape_cast %43 : vector<1xf32> to vector<1x1xf32>
    %45 = vector.shape_cast %44 : vector<1x1xf32> to vector<1x1xf32>
    %46 = vector.broadcast %45 : vector<1x1xf32> to vector<4x1xf32>
    %47 = vector.extract_strided_slice %31 {offsets = [12, 0], sizes = [4, 1], strides = [1, 1]} : vector<16x1xf32> to vector<4x1xf32>
    %cst_11 = arith.constant dense<0.000000e+00> : vector<1xf32>
    %48 = vector.multi_reduction <add>, %47, %cst_11 [0] : vector<4x1xf32> to vector<1xf32>
    %49 = vector.shape_cast %48 : vector<1xf32> to vector<1x1xf32>
    %50 = vector.shape_cast %49 : vector<1x1xf32> to vector<1x1xf32>
    %51 = vector.broadcast %50 : vector<1x1xf32> to vector<4x1xf32>
    %52 = tpu.concatenate %36, %41, %46, %51 in 0 : vector<4x1xf32>, vector<4x1xf32>, vector<4x1xf32>, vector<4x1xf32> -> vector<16x1xf32>
    %cst_12 = arith.constant 9.765625E-4 : f32
    %53 = vector.broadcast %cst_12 : f32 to vector<16x1xf32>
    %54 = arith.mulf %52, %53 : vector<16x1xf32>
    %cst_13 = arith.constant 9.99999974E-6 : f32
    %55 = vector.broadcast %cst_13 : f32 to vector<16x1xf32>
    %56 = arith.addf %54, %55 : vector<16x1xf32>
    %57 = math.rsqrt %56 : vector<16x1xf32>
    %58 = vector.broadcast %57 : vector<16x1xf32> to vector<16x256xf32>
    %59 = arith.mulf %28, %58 : vector<16x256xf32>
    %c0_14 = arith.constant 0 : index
    %c0_15 = arith.constant 0 : index
    %60 = vector.load %arg2[%c0_14, %c0_15] : memref<16x1xf32, #tpu.memory_space<vmem>>, vector<16x1xf32>
    %61 = vector.broadcast %60 : vector<16x1xf32> to vector<16x256xf32>
    %62 = arith.mulf %59, %61 : vector<16x256xf32>
    %c0_16 = arith.constant 0 : index
    %c0_17 = arith.constant 0 : index
    %63 = vector.load %arg3[%c0_16, %c0_17] : memref<16x1xf32, #tpu.memory_space<vmem>>, vector<16x1xf32>
    %64 = vector.broadcast %63 : vector<16x1xf32> to vector<16x256xf32>
    %65 = arith.addf %62, %64 : vector<16x256xf32>
    %66 = arith.negf %65 : vector<16x256xf32>
    %67 = math.exp %66 : vector<16x256xf32>
    %cst_18 = arith.constant 1.000000e+00 : f32
    %68 = vector.broadcast %cst_18 : f32 to vector<16x256xf32>
    %69 = arith.addf %68, %67 : vector<16x256xf32>
    %70 = arith.divf %68, %69 : vector<16x256xf32>
    %71 = arith.mulf %65, %70 : vector<16x256xf32>
    %72 = arith.truncf %71 : vector<16x256xf32> to vector<16x256xbf16>
    %73 = vector.extract_strided_slice %72 {offsets = [0, 183], sizes = [16, 73], strides = [1, 1]} : vector<16x256xbf16> to vector<16x73xbf16>
    %74 = vector.extract_strided_slice %72 {offsets = [0, 0], sizes = [16, 183], strides = [1, 1]} : vector<16x256xbf16> to vector<16x183xbf16>
    %75 = tpu.concatenate %73, %74 in 1 : vector<16x73xbf16>, vector<16x183xbf16> -> vector<16x256xbf16>
    %c0_19 = arith.constant 0 : index
    %c0_20 = arith.constant 0 : index
    %76 = vector.load %arg6[%c0_19, %c0_20] : memref<27x256xbf16, #tpu.memory_space<vmem>>, vector<1x256xbf16>
    %77 = vector.broadcast %76 : vector<1x256xbf16> to vector<16x256xbf16>
    %78 = arith.mulf %75, %77 : vector<16x256xbf16>
    %79 = vector.extract_strided_slice %72 {offsets = [0, 184], sizes = [16, 72], strides = [1, 1]} : vector<16x256xbf16> to vector<16x72xbf16>
    %80 = vector.extract_strided_slice %72 {offsets = [0, 0], sizes = [16, 184], strides = [1, 1]} : vector<16x256xbf16> to vector<16x184xbf16>
    %81 = tpu.concatenate %79, %80 in 1 : vector<16x72xbf16>, vector<16x184xbf16> -> vector<16x256xbf16>
    %c1 = arith.constant 1 : index
    %c0_21 = arith.constant 0 : index
    %82 = vector.load %arg6[%c1, %c0_21] : memref<27x256xbf16, #tpu.memory_space<vmem>>, vector<1x256xbf16>
    %83 = vector.broadcast %82 : vector<1x256xbf16> to vector<16x256xbf16>
    %84 = arith.mulf %81, %83 : vector<16x256xbf16>
    %85 = vector.extract_strided_slice %72 {offsets = [0, 185], sizes = [16, 71], strides = [1, 1]} : vector<16x256xbf16> to vector<16x71xbf16>
    %86 = vector.extract_strided_slice %72 {offsets = [0, 0], sizes = [16, 185], strides = [1, 1]} : vector<16x256xbf16> to vector<16x185xbf16>
    %87 = tpu.concatenate %85, %86 in 1 : vector<16x71xbf16>, vector<16x185xbf16> -> vector<16x256xbf16>
    %c2 = arith.constant 2 : index
    %c0_22 = arith.constant 0 : index
    %88 = vector.load %arg6[%c2, %c0_22] : memref<27x256xbf16, #tpu.memory_space<vmem>>, vector<1x256xbf16>
    %89 = vector.broadcast %88 : vector<1x256xbf16> to vector<16x256xbf16>
    %90 = arith.mulf %87, %89 : vector<16x256xbf16>
    %91 = vector.extract_strided_slice %72 {offsets = [0, 191], sizes = [16, 65], strides = [1, 1]} : vector<16x256xbf16> to vector<16x65xbf16>
    %92 = vector.extract_strided_slice %72 {offsets = [0, 0], sizes = [16, 191], strides = [1, 1]} : vector<16x256xbf16> to vector<16x191xbf16>
    %93 = tpu.concatenate %91, %92 in 1 : vector<16x65xbf16>, vector<16x191xbf16> -> vector<16x256xbf16>
    %c3 = arith.constant 3 : index
    %c0_23 = arith.constant 0 : index
    %94 = vector.load %arg6[%c3, %c0_23] : memref<27x256xbf16, #tpu.memory_space<vmem>>, vector<1x256xbf16>
    %95 = vector.broadcast %94 : vector<1x256xbf16> to vector<16x256xbf16>
    %96 = arith.mulf %93, %95 : vector<16x256xbf16>
    %97 = vector.extract_strided_slice %72 {offsets = [0, 192], sizes = [16, 64], strides = [1, 1]} : vector<16x256xbf16> to vector<16x64xbf16>
    %98 = vector.extract_strided_slice %72 {offsets = [0, 0], sizes = [16, 192], strides = [1, 1]} : vector<16x256xbf16> to vector<16x192xbf16>
    %99 = tpu.concatenate %97, %98 in 1 : vector<16x64xbf16>, vector<16x192xbf16> -> vector<16x256xbf16>
    %c4 = arith.constant 4 : index
    %c0_24 = arith.constant 0 : index
    %100 = vector.load %arg6[%c4, %c0_24] : memref<27x256xbf16, #tpu.memory_space<vmem>>, vector<1x256xbf16>
    %101 = vector.broadcast %100 : vector<1x256xbf16> to vector<16x256xbf16>
    %102 = arith.mulf %99, %101 : vector<16x256xbf16>
    %103 = vector.extract_strided_slice %72 {offsets = [0, 193], sizes = [16, 63], strides = [1, 1]} : vector<16x256xbf16> to vector<16x63xbf16>
    %104 = vector.extract_strided_slice %72 {offsets = [0, 0], sizes = [16, 193], strides = [1, 1]} : vector<16x256xbf16> to vector<16x193xbf16>
    %105 = tpu.concatenate %103, %104 in 1 : vector<16x63xbf16>, vector<16x193xbf16> -> vector<16x256xbf16>
    %c5 = arith.constant 5 : index
    %c0_25 = arith.constant 0 : index
    %106 = vector.load %arg6[%c5, %c0_25] : memref<27x256xbf16, #tpu.memory_space<vmem>>, vector<1x256xbf16>
    %107 = vector.broadcast %106 : vector<1x256xbf16> to vector<16x256xbf16>
    %108 = arith.mulf %105, %107 : vector<16x256xbf16>
    %109 = vector.extract_strided_slice %72 {offsets = [0, 199], sizes = [16, 57], strides = [1, 1]} : vector<16x256xbf16> to vector<16x57xbf16>
    %110 = vector.extract_strided_slice %72 {offsets = [0, 0], sizes = [16, 199], strides = [1, 1]} : vector<16x256xbf16> to vector<16x199xbf16>
    %111 = tpu.concatenate %109, %110 in 1 : vector<16x57xbf16>, vector<16x199xbf16> -> vector<16x256xbf16>
    %c6 = arith.constant 6 : index
    %c0_26 = arith.constant 0 : index
    %112 = vector.load %arg6[%c6, %c0_26] : memref<27x256xbf16, #tpu.memory_space<vmem>>, vector<1x256xbf16>
    %113 = vector.broadcast %112 : vector<1x256xbf16> to vector<16x256xbf16>
    %114 = arith.mulf %111, %113 : vector<16x256xbf16>
    %115 = vector.extract_strided_slice %72 {offsets = [0, 200], sizes = [16, 56], strides = [1, 1]} : vector<16x256xbf16> to vector<16x56xbf16>
    %116 = vector.extract_strided_slice %72 {offsets = [0, 0], sizes = [16, 200], strides = [1, 1]} : vector<16x256xbf16> to vector<16x200xbf16>
    %117 = tpu.concatenate %115, %116 in 1 : vector<16x56xbf16>, vector<16x200xbf16> -> vector<16x256xbf16>
    %c7 = arith.constant 7 : index
    %c0_27 = arith.constant 0 : index
    %118 = vector.load %arg6[%c7, %c0_27] : memref<27x256xbf16, #tpu.memory_space<vmem>>, vector<1x256xbf16>
    %119 = vector.broadcast %118 : vector<1x256xbf16> to vector<16x256xbf16>
    %120 = arith.mulf %117, %119 : vector<16x256xbf16>
    %121 = vector.extract_strided_slice %72 {offsets = [0, 201], sizes = [16, 55], strides = [1, 1]} : vector<16x256xbf16> to vector<16x55xbf16>
    %122 = vector.extract_strided_slice %72 {offsets = [0, 0], sizes = [16, 201], strides = [1, 1]} : vector<16x256xbf16> to vector<16x201xbf16>
    %123 = tpu.concatenate %121, %122 in 1 : vector<16x55xbf16>, vector<16x201xbf16> -> vector<16x256xbf16>
    %c8 = arith.constant 8 : index
    %c0_28 = arith.constant 0 : index
    %124 = vector.load %arg6[%c8, %c0_28] : memref<27x256xbf16, #tpu.memory_space<vmem>>, vector<1x256xbf16>
    %125 = vector.broadcast %124 : vector<1x256xbf16> to vector<16x256xbf16>
    %126 = arith.mulf %123, %125 : vector<16x256xbf16>
    %127 = tpu.concatenate %78, %84, %90, %96, %102, %108, %114, %120, %126 in 0 : vector<16x256xbf16>, vector<16x256xbf16>, vector<16x256xbf16>, vector<16x256xbf16>, vector<16x256xbf16>, vector<16x256xbf16>, vector<16x256xbf16>, vector<16x256xbf16>, vector<16x256xbf16> -> vector<144x256xbf16>
    %c0_29 = arith.constant 0 : index
    %c0_30 = arith.constant 0 : index
    %c0_31 = arith.constant 0 : index
    %128 = vector.load %arg4[%c0_29, %c0_30, %c0_31] : memref<3x32x144xbf16, #tpu.memory_space<vmem>>, vector<1x32x144xbf16>
    %129 = vector.shape_cast %128 : vector<1x32x144xbf16> to vector<32x144xbf16>
    %cst_32 = arith.constant dense<0.000000e+00> : vector<32x256xf32>
    %130 = tpu.matmul %129, %127, %cst_32 {dimension_numbers = #tpu.dot_dimension_numbers<[1], [0], [0], [1], [0, 0, 1, 1], [], []>} : vector<32x144xbf16>, vector<144x256xbf16>, vector<32x256xf32> -> vector<32x256xf32>
    %131 = vector.extract_strided_slice %72 {offsets = [0, 247], sizes = [16, 9], strides = [1, 1]} : vector<16x256xbf16> to vector<16x9xbf16>
    %132 = vector.extract_strided_slice %72 {offsets = [0, 0], sizes = [16, 247], strides = [1, 1]} : vector<16x256xbf16> to vector<16x247xbf16>
    %133 = tpu.concatenate %131, %132 in 1 : vector<16x9xbf16>, vector<16x247xbf16> -> vector<16x256xbf16>
    %c9 = arith.constant 9 : index
    %c0_33 = arith.constant 0 : index
    %134 = vector.load %arg6[%c9, %c0_33] : memref<27x256xbf16, #tpu.memory_space<vmem>>, vector<1x256xbf16>
    %135 = vector.broadcast %134 : vector<1x256xbf16> to vector<16x256xbf16>
    %136 = arith.mulf %133, %135 : vector<16x256xbf16>
    %137 = vector.extract_strided_slice %72 {offsets = [0, 248], sizes = [16, 8], strides = [1, 1]} : vector<16x256xbf16> to vector<16x8xbf16>
    %138 = vector.extract_strided_slice %72 {offsets = [0, 0], sizes = [16, 248], strides = [1, 1]} : vector<16x256xbf16> to vector<16x248xbf16>
    %139 = tpu.concatenate %137, %138 in 1 : vector<16x8xbf16>, vector<16x248xbf16> -> vector<16x256xbf16>
    %c10 = arith.constant 10 : index
    %c0_34 = arith.constant 0 : index
    %140 = vector.load %arg6[%c10, %c0_34] : memref<27x256xbf16, #tpu.memory_space<vmem>>, vector<1x256xbf16>
    %141 = vector.broadcast %140 : vector<1x256xbf16> to vector<16x256xbf16>
    %142 = arith.mulf %139, %141 : vector<16x256xbf16>
    %143 = vector.extract_strided_slice %72 {offsets = [0, 249], sizes = [16, 7], strides = [1, 1]} : vector<16x256xbf16> to vector<16x7xbf16>
    %144 = vector.extract_strided_slice %72 {offsets = [0, 0], sizes = [16, 249], strides = [1, 1]} : vector<16x256xbf16> to vector<16x249xbf16>
    %145 = tpu.concatenate %143, %144 in 1 : vector<16x7xbf16>, vector<16x249xbf16> -> vector<16x256xbf16>
    %c11 = arith.constant 11 : index
    %c0_35 = arith.constant 0 : index
    %146 = vector.load %arg6[%c11, %c0_35] : memref<27x256xbf16, #tpu.memory_space<vmem>>, vector<1x256xbf16>
    %147 = vector.broadcast %146 : vector<1x256xbf16> to vector<16x256xbf16>
    %148 = arith.mulf %145, %147 : vector<16x256xbf16>
    %149 = vector.extract_strided_slice %72 {offsets = [0, 255], sizes = [16, 1], strides = [1, 1]} : vector<16x256xbf16> to vector<16x1xbf16>
    %150 = vector.extract_strided_slice %72 {offsets = [0, 0], sizes = [16, 255], strides = [1, 1]} : vector<16x256xbf16> to vector<16x255xbf16>
    %151 = tpu.concatenate %149, %150 in 1 : vector<16x1xbf16>, vector<16x255xbf16> -> vector<16x256xbf16>
    %c12 = arith.constant 12 : index
    %c0_36 = arith.constant 0 : index
    %152 = vector.load %arg6[%c12, %c0_36] : memref<27x256xbf16, #tpu.memory_space<vmem>>, vector<1x256xbf16>
    %153 = vector.broadcast %152 : vector<1x256xbf16> to vector<16x256xbf16>
    %154 = arith.mulf %151, %153 : vector<16x256xbf16>
    %c13 = arith.constant 13 : index
    %c0_37 = arith.constant 0 : index
    %155 = vector.load %arg6[%c13, %c0_37] : memref<27x256xbf16, #tpu.memory_space<vmem>>, vector<1x256xbf16>
    %156 = vector.broadcast %155 : vector<1x256xbf16> to vector<16x256xbf16>
    %157 = arith.mulf %72, %156 : vector<16x256xbf16>
    %158 = vector.extract_strided_slice %72 {offsets = [0, 1], sizes = [16, 255], strides = [1, 1]} : vector<16x256xbf16> to vector<16x255xbf16>
    %159 = vector.extract_strided_slice %72 {offsets = [0, 0], sizes = [16, 1], strides = [1, 1]} : vector<16x256xbf16> to vector<16x1xbf16>
    %160 = tpu.concatenate %158, %159 in 1 : vector<16x255xbf16>, vector<16x1xbf16> -> vector<16x256xbf16>
    %c14 = arith.constant 14 : index
    %c0_38 = arith.constant 0 : index
    %161 = vector.load %arg6[%c14, %c0_38] : memref<27x256xbf16, #tpu.memory_space<vmem>>, vector<1x256xbf16>
    %162 = vector.broadcast %161 : vector<1x256xbf16> to vector<16x256xbf16>
    %163 = arith.mulf %160, %162 : vector<16x256xbf16>
    %164 = vector.extract_strided_slice %72 {offsets = [0, 7], sizes = [16, 249], strides = [1, 1]} : vector<16x256xbf16> to vector<16x249xbf16>
    %165 = vector.extract_strided_slice %72 {offsets = [0, 0], sizes = [16, 7], strides = [1, 1]} : vector<16x256xbf16> to vector<16x7xbf16>
    %166 = tpu.concatenate %164, %165 in 1 : vector<16x249xbf16>, vector<16x7xbf16> -> vector<16x256xbf16>
    %c15 = arith.constant 15 : index
    %c0_39 = arith.constant 0 : index
    %167 = vector.load %arg6[%c15, %c0_39] : memref<27x256xbf16, #tpu.memory_space<vmem>>, vector<1x256xbf16>
    %168 = vector.broadcast %167 : vector<1x256xbf16> to vector<16x256xbf16>
    %169 = arith.mulf %166, %168 : vector<16x256xbf16>
    %170 = vector.extract_strided_slice %72 {offsets = [0, 8], sizes = [16, 248], strides = [1, 1]} : vector<16x256xbf16> to vector<16x248xbf16>
    %171 = vector.extract_strided_slice %72 {offsets = [0, 0], sizes = [16, 8], strides = [1, 1]} : vector<16x256xbf16> to vector<16x8xbf16>
    %172 = tpu.concatenate %170, %171 in 1 : vector<16x248xbf16>, vector<16x8xbf16> -> vector<16x256xbf16>
    %c16 = arith.constant 16 : index
    %c0_40 = arith.constant 0 : index
    %173 = vector.load %arg6[%c16, %c0_40] : memref<27x256xbf16, #tpu.memory_space<vmem>>, vector<1x256xbf16>
    %174 = vector.broadcast %173 : vector<1x256xbf16> to vector<16x256xbf16>
    %175 = arith.mulf %172, %174 : vector<16x256xbf16>
    %176 = vector.extract_strided_slice %72 {offsets = [0, 9], sizes = [16, 247], strides = [1, 1]} : vector<16x256xbf16> to vector<16x247xbf16>
    %177 = vector.extract_strided_slice %72 {offsets = [0, 0], sizes = [16, 9], strides = [1, 1]} : vector<16x256xbf16> to vector<16x9xbf16>
    %178 = tpu.concatenate %176, %177 in 1 : vector<16x247xbf16>, vector<16x9xbf16> -> vector<16x256xbf16>
    %c17 = arith.constant 17 : index
    %c0_41 = arith.constant 0 : index
    %179 = vector.load %arg6[%c17, %c0_41] : memref<27x256xbf16, #tpu.memory_space<vmem>>, vector<1x256xbf16>
    %180 = vector.broadcast %179 : vector<1x256xbf16> to vector<16x256xbf16>
    %181 = arith.mulf %178, %180 : vector<16x256xbf16>
    %182 = tpu.concatenate %136, %142, %148, %154, %157, %163, %169, %175, %181 in 0 : vector<16x256xbf16>, vector<16x256xbf16>, vector<16x256xbf16>, vector<16x256xbf16>, vector<16x256xbf16>, vector<16x256xbf16>, vector<16x256xbf16>, vector<16x256xbf16>, vector<16x256xbf16> -> vector<144x256xbf16>
    %c1_42 = arith.constant 1 : index
    %c0_43 = arith.constant 0 : index
    %c0_44 = arith.constant 0 : index
    %183 = vector.load %arg4[%c1_42, %c0_43, %c0_44] : memref<3x32x144xbf16, #tpu.memory_space<vmem>>, vector<1x32x144xbf16>
    %184 = vector.shape_cast %183 : vector<1x32x144xbf16> to vector<32x144xbf16>
    %cst_45 = arith.constant dense<0.000000e+00> : vector<32x256xf32>
    %185 = tpu.matmul %184, %182, %cst_45 {dimension_numbers = #tpu.dot_dimension_numbers<[1], [0], [0], [1], [0, 0, 1, 1], [], []>} : vector<32x144xbf16>, vector<144x256xbf16>, vector<32x256xf32> -> vector<32x256xf32>
    %186 = arith.addf %130, %185 : vector<32x256xf32>
    %187 = vector.extract_strided_slice %72 {offsets = [0, 55], sizes = [16, 201], strides = [1, 1]} : vector<16x256xbf16> to vector<16x201xbf16>
    %188 = vector.extract_strided_slice %72 {offsets = [0, 0], sizes = [16, 55], strides = [1, 1]} : vector<16x256xbf16> to vector<16x55xbf16>
    %189 = tpu.concatenate %187, %188 in 1 : vector<16x201xbf16>, vector<16x55xbf16> -> vector<16x256xbf16>
    %c18 = arith.constant 18 : index
    %c0_46 = arith.constant 0 : index
    %190 = vector.load %arg6[%c18, %c0_46] : memref<27x256xbf16, #tpu.memory_space<vmem>>, vector<1x256xbf16>
    %191 = vector.broadcast %190 : vector<1x256xbf16> to vector<16x256xbf16>
    %192 = arith.mulf %189, %191 : vector<16x256xbf16>
    %193 = vector.extract_strided_slice %72 {offsets = [0, 56], sizes = [16, 200], strides = [1, 1]} : vector<16x256xbf16> to vector<16x200xbf16>
    %194 = vector.extract_strided_slice %72 {offsets = [0, 0], sizes = [16, 56], strides = [1, 1]} : vector<16x256xbf16> to vector<16x56xbf16>
    %195 = tpu.concatenate %193, %194 in 1 : vector<16x200xbf16>, vector<16x56xbf16> -> vector<16x256xbf16>
    %c19 = arith.constant 19 : index
    %c0_47 = arith.constant 0 : index
    %196 = vector.load %arg6[%c19, %c0_47] : memref<27x256xbf16, #tpu.memory_space<vmem>>, vector<1x256xbf16>
    %197 = vector.broadcast %196 : vector<1x256xbf16> to vector<16x256xbf16>
    %198 = arith.mulf %195, %197 : vector<16x256xbf16>
    %199 = vector.extract_strided_slice %72 {offsets = [0, 57], sizes = [16, 199], strides = [1, 1]} : vector<16x256xbf16> to vector<16x199xbf16>
    %200 = vector.extract_strided_slice %72 {offsets = [0, 0], sizes = [16, 57], strides = [1, 1]} : vector<16x256xbf16> to vector<16x57xbf16>
    %201 = tpu.concatenate %199, %200 in 1 : vector<16x199xbf16>, vector<16x57xbf16> -> vector<16x256xbf16>
    %c20 = arith.constant 20 : index
    %c0_48 = arith.constant 0 : index
    %202 = vector.load %arg6[%c20, %c0_48] : memref<27x256xbf16, #tpu.memory_space<vmem>>, vector<1x256xbf16>
    %203 = vector.broadcast %202 : vector<1x256xbf16> to vector<16x256xbf16>
    %204 = arith.mulf %201, %203 : vector<16x256xbf16>
    %205 = vector.extract_strided_slice %72 {offsets = [0, 63], sizes = [16, 193], strides = [1, 1]} : vector<16x256xbf16> to vector<16x193xbf16>
    %206 = vector.extract_strided_slice %72 {offsets = [0, 0], sizes = [16, 63], strides = [1, 1]} : vector<16x256xbf16> to vector<16x63xbf16>
    %207 = tpu.concatenate %205, %206 in 1 : vector<16x193xbf16>, vector<16x63xbf16> -> vector<16x256xbf16>
    %c21 = arith.constant 21 : index
    %c0_49 = arith.constant 0 : index
    %208 = vector.load %arg6[%c21, %c0_49] : memref<27x256xbf16, #tpu.memory_space<vmem>>, vector<1x256xbf16>
    %209 = vector.broadcast %208 : vector<1x256xbf16> to vector<16x256xbf16>
    %210 = arith.mulf %207, %209 : vector<16x256xbf16>
    %211 = vector.extract_strided_slice %72 {offsets = [0, 64], sizes = [16, 192], strides = [1, 1]} : vector<16x256xbf16> to vector<16x192xbf16>
    %212 = vector.extract_strided_slice %72 {offsets = [0, 0], sizes = [16, 64], strides = [1, 1]} : vector<16x256xbf16> to vector<16x64xbf16>
    %213 = tpu.concatenate %211, %212 in 1 : vector<16x192xbf16>, vector<16x64xbf16> -> vector<16x256xbf16>
    %c22 = arith.constant 22 : index
    %c0_50 = arith.constant 0 : index
    %214 = vector.load %arg6[%c22, %c0_50] : memref<27x256xbf16, #tpu.memory_space<vmem>>, vector<1x256xbf16>
    %215 = vector.broadcast %214 : vector<1x256xbf16> to vector<16x256xbf16>
    %216 = arith.mulf %213, %215 : vector<16x256xbf16>
    %217 = vector.extract_strided_slice %72 {offsets = [0, 65], sizes = [16, 191], strides = [1, 1]} : vector<16x256xbf16> to vector<16x191xbf16>
    %218 = vector.extract_strided_slice %72 {offsets = [0, 0], sizes = [16, 65], strides = [1, 1]} : vector<16x256xbf16> to vector<16x65xbf16>
    %219 = tpu.concatenate %217, %218 in 1 : vector<16x191xbf16>, vector<16x65xbf16> -> vector<16x256xbf16>
    %c23 = arith.constant 23 : index
    %c0_51 = arith.constant 0 : index
    %220 = vector.load %arg6[%c23, %c0_51] : memref<27x256xbf16, #tpu.memory_space<vmem>>, vector<1x256xbf16>
    %221 = vector.broadcast %220 : vector<1x256xbf16> to vector<16x256xbf16>
    %222 = arith.mulf %219, %221 : vector<16x256xbf16>
    %223 = vector.extract_strided_slice %72 {offsets = [0, 71], sizes = [16, 185], strides = [1, 1]} : vector<16x256xbf16> to vector<16x185xbf16>
    %224 = vector.extract_strided_slice %72 {offsets = [0, 0], sizes = [16, 71], strides = [1, 1]} : vector<16x256xbf16> to vector<16x71xbf16>
    %225 = tpu.concatenate %223, %224 in 1 : vector<16x185xbf16>, vector<16x71xbf16> -> vector<16x256xbf16>
    %c24 = arith.constant 24 : index
    %c0_52 = arith.constant 0 : index
    %226 = vector.load %arg6[%c24, %c0_52] : memref<27x256xbf16, #tpu.memory_space<vmem>>, vector<1x256xbf16>
    %227 = vector.broadcast %226 : vector<1x256xbf16> to vector<16x256xbf16>
    %228 = arith.mulf %225, %227 : vector<16x256xbf16>
    %229 = vector.extract_strided_slice %72 {offsets = [0, 72], sizes = [16, 184], strides = [1, 1]} : vector<16x256xbf16> to vector<16x184xbf16>
    %230 = vector.extract_strided_slice %72 {offsets = [0, 0], sizes = [16, 72], strides = [1, 1]} : vector<16x256xbf16> to vector<16x72xbf16>
    %231 = tpu.concatenate %229, %230 in 1 : vector<16x184xbf16>, vector<16x72xbf16> -> vector<16x256xbf16>
    %c25 = arith.constant 25 : index
    %c0_53 = arith.constant 0 : index
    %232 = vector.load %arg6[%c25, %c0_53] : memref<27x256xbf16, #tpu.memory_space<vmem>>, vector<1x256xbf16>
    %233 = vector.broadcast %232 : vector<1x256xbf16> to vector<16x256xbf16>
    %234 = arith.mulf %231, %233 : vector<16x256xbf16>
    %235 = vector.extract_strided_slice %72 {offsets = [0, 73], sizes = [16, 183], strides = [1, 1]} : vector<16x256xbf16> to vector<16x183xbf16>
    %236 = vector.extract_strided_slice %72 {offsets = [0, 0], sizes = [16, 73], strides = [1, 1]} : vector<16x256xbf16> to vector<16x73xbf16>
    %237 = tpu.concatenate %235, %236 in 1 : vector<16x183xbf16>, vector<16x73xbf16> -> vector<16x256xbf16>
    %c26 = arith.constant 26 : index
    %c0_54 = arith.constant 0 : index
    %238 = vector.load %arg6[%c26, %c0_54] : memref<27x256xbf16, #tpu.memory_space<vmem>>, vector<1x256xbf16>
    %239 = vector.broadcast %238 : vector<1x256xbf16> to vector<16x256xbf16>
    %240 = arith.mulf %237, %239 : vector<16x256xbf16>
    %241 = tpu.concatenate %192, %198, %204, %210, %216, %222, %228, %234, %240 in 0 : vector<16x256xbf16>, vector<16x256xbf16>, vector<16x256xbf16>, vector<16x256xbf16>, vector<16x256xbf16>, vector<16x256xbf16>, vector<16x256xbf16>, vector<16x256xbf16>, vector<16x256xbf16> -> vector<144x256xbf16>
    %c2_55 = arith.constant 2 : index
    %c0_56 = arith.constant 0 : index
    %c0_57 = arith.constant 0 : index
    %242 = vector.load %arg4[%c2_55, %c0_56, %c0_57] : memref<3x32x144xbf16, #tpu.memory_space<vmem>>, vector<1x32x144xbf16>
    %243 = vector.shape_cast %242 : vector<1x32x144xbf16> to vector<32x144xbf16>
    %cst_58 = arith.constant dense<0.000000e+00> : vector<32x256xf32>
    %244 = tpu.matmul %243, %241, %cst_58 {dimension_numbers = #tpu.dot_dimension_numbers<[1], [0], [0], [1], [0, 0, 1, 1], [], []>} : vector<32x144xbf16>, vector<144x256xbf16>, vector<32x256xf32> -> vector<32x256xf32>
    %245 = arith.addf %186, %244 : vector<32x256xf32>
    %c0_59 = arith.constant 0 : index
    %c0_60 = arith.constant 0 : index
    %246 = vector.load %arg5[%c0_59, %c0_60] : memref<32x1xf32, #tpu.memory_space<vmem>>, vector<32x1xf32>
    %247 = vector.broadcast %246 : vector<32x1xf32> to vector<32x256xf32>
    %248 = arith.addf %245, %247 : vector<32x256xf32>
    %c0_61 = arith.constant 0 : index
    %c0_62 = arith.constant 0 : index
    %c0_63 = arith.constant 0 : index
    %249 = vector.load %arg7[%c0_61, %c0_62, %c0_63] : memref<1x32x256xf32, #tpu.memory_space<vmem>>, vector<1x32x256xf32>
    %250 = vector.shape_cast %249 : vector<1x32x256xf32> to vector<32x256xf32>
    %251 = vector.shape_cast %248 : vector<32x256xf32> to vector<1x32x256xf32>
    tpu.vector_store %arg7[%c0_61, %c0_62, %c0_63], %251 {strides = array<i32>} : memref<1x32x256xf32, #tpu.memory_space<vmem>>, vector<1x32x256xf32>,
    return
  }
  func.func @transform_0(%arg0: i32) -> (i32, i32, i32) {
    %c0_i32 = arith.constant 0 : i32
    %c0_i32_0 = arith.constant 0 : i32
    %c0_i32_1 = arith.constant 0 : i32
    return %arg0, %c0_i32, %c0_i32_0 : i32, i32, i32
  }
  func.func @transform_1(%arg0: i32) -> (i32, i32) {
    %c0_i32 = arith.constant 0 : i32
    %c0_i32_0 = arith.constant 0 : i32
    %c0_i32_1 = arith.constant 0 : i32
    return %c0_i32, %c0_i32_0 : i32, i32
  }
  func.func @transform_2(%arg0: i32) -> (i32, i32) {
    %c0_i32 = arith.constant 0 : i32
    %c0_i32_0 = arith.constant 0 : i32
    %c0_i32_1 = arith.constant 0 : i32
    return %c0_i32, %c0_i32_0 : i32, i32
  }
  func.func @transform_3(%arg0: i32) -> (i32, i32, i32) {
    %c0_i32 = arith.constant 0 : i32
    %c0_i32_0 = arith.constant 0 : i32
    %c0_i32_1 = arith.constant 0 : i32
    %c0_i32_2 = arith.constant 0 : i32
    return %c0_i32, %c0_i32_0, %c0_i32_1 : i32, i32, i32
  }
  func.func @transform_4(%arg0: i32) -> (i32, i32) {
    %c0_i32 = arith.constant 0 : i32
    %c0_i32_0 = arith.constant 0 : i32
    %c0_i32_1 = arith.constant 0 : i32
    return %c0_i32, %c0_i32_0 : i32, i32
  }
  func.func @transform_5(%arg0: i32) -> (i32, i32) {
    %c0_i32 = arith.constant 0 : i32
    %c0_i32_0 = arith.constant 0 : i32
    %c0_i32_1 = arith.constant 0 : i32
    return %c0_i32, %c0_i32_0 : i32, i32
  }
  func.func @transform_6(%arg0: i32) -> (i32, i32, i32) {
    %c0_i32 = arith.constant 0 : i32
    %c0_i32_0 = arith.constant 0 : i32
    %c0_i32_1 = arith.constant 0 : i32
    return %arg0, %c0_i32, %c0_i32_0 : i32, i32, i32
  }
}

</mosaic_0001>

<llo_original>
// kernel: block_forward.1
$region0: #{block_forward.1}
  #allocation0 [shape = 'u32[]', space=smem, size = 0x4, offset = 0x4, fixed_abs, tag = 'smem constant byte address 0x4 - core index']
  #allocation1 [shape = 'u32[144,128]{1,0:T(1,128)}', space=vmem, size = 0x12000, scoped, tag = 'internal scratch']
  %s0 = inlined_call_operand.vmem [shape: f32[2,16,256], index: 0, kind: input, shape index: {}]
  %s1 = inlined_call_operand.vmem [shape: f32[16,1], index: 1, kind: input, shape index: {}]
  %s2 = inlined_call_operand.vmem [shape: f32[16,1], index: 2, kind: input, shape index: {}]
  %s3 = inlined_call_operand.vmem [shape: bf16[3,32,144], index: 3, kind: input, shape index: {}]
  %s4 = inlined_call_operand.vmem [shape: f32[32,1], index: 4, kind: input, shape index: {}]
  %s5 = inlined_call_operand.vmem [shape: bf16[27,256], index: 5, kind: input, shape index: {}]
  %s6 = inlined_call_operand.vmem [shape: f32[2,32,256], index: 6, kind: output, shape index: {}]
  %s7 = sld [smem:[#allocation0]]
  $region57: #{block_forward.1} parent=0
    _
  %s9 = ssub.s32 1, %s7
  %s10 = scalar_select 0, %s9, %s7
  loop: start=0, step=1, limit=4
  $region2: #{block_forward.1} parent=0 // loop_pre_header
    _
  $region3: #{block_forward.1} parent=0 // loop_header
    %s12 = sphi 0, %s16
    %p13 = scmp.ge.s32.totalorder %s12, 4
    %s22 = sphi 0, %s24
    %s25 = sphi 0, %s22
    %s26 = sphi 0, %s25
    %s42 = sphi 0, %s26
    %s46 = sphi 0, %s46
    %s48 = sphi 0, %s46
    %s49 = sphi 0, %s48
    %s63 = sphi 0, %s49
    %s67 = sphi 0, %s67
    %s69 = sphi 0, %s67
    %s70 = sphi 0, %s69
    %s84 = sphi 0, %s70
    %s88 = sphi 0, %s88
    %s90 = sphi 0, %s88
    %s91 = sphi 0, %s90
    %s105 = sphi 0, %s91
    %s109 = sphi 0, %s109
    %s111 = sphi 0, %s109
    %s112 = sphi 0, %s111
    %s126 = sphi 0, %s112
    %s130 = sphi 0, %s130
    %s132 = sphi 0, %s130
    %s133 = sphi 0, %s132
    %s147 = sphi 0, %s133
    %s153 = sphi 0, %s155
    %s156 = sphi 0, %s153
    %s157 = sphi 0, %s156
    %s173 = sphi 0, %s157
  $region4: #{block_forward.1} parent=0 // loop_header_branch
    %15 = sbr.rel (%p13) target = $region8
  $region5: #{block_forward.1} parent=0 // loop_body
    %s17 = ssub.s32 %s12, 1
    %s18 = ssub.s32 %s12, 2
    %s19 = sadd.s32 %s12, 1
    %s20 = ssub.s32 %s12, %s19
    %p21 = scmp.eq.s32.totalorder %s20, 0
    %s23 = sadd.s32 %s22, 1
    %s24 = scalar_select %p21, %s22, %s23
    %p27 = pneg %p21
    %p28 = scmp.eq.s32.totalorder %s12, 1
    %p29 = por %p27, %p28
    %p30 = scmp.ne.s32.totalorder %s22, %s25
    %p31 = scmp.eq.s32.totalorder %s12, 0
    %p32 = por %p30, %p31
    %p33 = scmp.ne.s32.totalorder %s22, %s25
    %p34 = scmp.eq.s32.totalorder %s17, 1
    %p35 = por %p33, %p34
    %p36 = scmp.ne.s32.totalorder %s25, %s26
    %p37 = scmp.eq.s32.totalorder %s17, 0
    %p38 = por %p36, %p37
    %p39 = scmp.ne.s32.totalorder %s25, %s26
    %p40 = scmp.eq.s32.totalorder %s18, 1
    %p41 = por %p39, %p40
    %p43 = scmp.ne.s32.totalorder %s26, %s42
    %p44 = scmp.eq.s32.totalorder %s18, 0
    %p45 = por %p43, %p44
    %s47 = sadd.s32 %s46, 1
    %p50 = scmp.eq.s32.totalorder %s12, 1
    %p51 = scmp.ne.s32.totalorder %s46, %s48
    %p52 = scmp.eq.s32.totalorder %s12, 0
    %p53 = por %p51, %p52
    %p54 = scmp.ne.s32.totalorder %s46, %s48
    %p55 = scmp.eq.s32.totalorder %s17, 1
    %p56 = por %p54, %p55
    %p57 = scmp.ne.s32.totalorder %s48, %s49
    %p58 = scmp.eq.s32.totalorder %s17, 0
    %p59 = por %p57, %p58
    %p60 = scmp.ne.s32.totalorder %s48, %s49
    %p61 = scmp.eq.s32.totalorder %s18, 1
    %p62 = por %p60, %p61
    %p64 = scmp.ne.s32.totalorder %s49, %s63
    %p65 = scmp.eq.s32.totalorder %s18, 0
    %p66 = por %p64, %p65
    %s68 = sadd.s32 %s67, 1
    %p71 = scmp.eq.s32.totalorder %s12, 1
    %p72 = scmp.ne.s32.totalorder %s67, %s69
    %p73 = scmp.eq.s32.totalorder %s12, 0
    %p74 = por %p72, %p73
    %p75 = scmp.ne.s32.totalorder %s67, %s69
    %p76 = scmp.eq.s32.totalorder %s17, 1
    %p77 = por %p75, %p76
    %p78 = scmp.ne.s32.totalorder %s69, %s70
    %p79 = scmp.eq.s32.totalorder %s17, 0
    %p80 = por %p78, %p79
    %p81 = scmp.ne.s32.totalorder %s69, %s70
    %p82 = scmp.eq.s32.totalorder %s18, 1
    %p83 = por %p81, %p82
    %p85 = scmp.ne.s32.totalorder %s70, %s84
    %p86 = scmp.eq.s32.totalorder %s18, 0
    %p87 = por %p85, %p86
    %s89 = sadd.s32 %s88, 1
    %p92 = scmp.eq.s32.totalorder %s12, 1
    %p93 = scmp.ne.s32.totalorder %s88, %s90
    %p94 = scmp.eq.s32.totalorder %s12, 0
    %p95 = por %p93, %p94
    %p96 = scmp.ne.s32.totalorder %s88, %s90
    %p97 = scmp.eq.s32.totalorder %s17, 1
    %p98 = por %p96, %p97
    %p99 = scmp.ne.s32.totalorder %s90, %s91
    %p100 = scmp.eq.s32.totalorder %s17, 0
    %p101 = por %p99, %p100
    %p102 = scmp.ne.s32.totalorder %s90, %s91
    %p103 = scmp.eq.s32.totalorder %s18, 1
    %p104 = por %p102, %p103
    %p106 = scmp.ne.s32.totalorder %s91, %s105
    %p107 = scmp.eq.s32.totalorder %s18, 0
    %p108 = por %p106, %p107
    %s110 = sadd.s32 %s109, 1
    %p113 = scmp.eq.s32.totalorder %s12, 1
    %p114 = scmp.ne.s32.totalorder %s109, %s111
    %p115 = scmp.eq.s32.totalorder %s12, 0
    %p116 = por %p114, %p115
    %p117 = scmp.ne.s32.totalorder %s109, %s111
    %p118 = scmp.eq.s32.totalorder %s17, 1
    %p119 = por %p117, %p118
    %p120 = scmp.ne.s32.totalorder %s111, %s112
    %p121 = scmp.eq.s32.totalorder %s17, 0
    %p122 = por %p120, %p121
    %p123 = scmp.ne.s32.totalorder %s111, %s112
    %p124 = scmp.eq.s32.totalorder %s18, 1
    %p125 = por %p123, %p124
    %p127 = scmp.ne.s32.totalorder %s112, %s126
    %p128 = scmp.eq.s32.totalorder %s18, 0
    %p129 = por %p127, %p128
    %s131 = sadd.s32 %s130, 1
    %p134 = scmp.eq.s32.totalorder %s12, 1
    %p135 = scmp.ne.s32.totalorder %s130, %s132
    %p136 = scmp.eq.s32.totalorder %s12, 0
    %p137 = por %p135, %p136
    %p138 = scmp.ne.s32.totalorder %s130, %s132
    %p139 = scmp.eq.s32.totalorder %s17, 1
    %p140 = por %p138, %p139
    %p141 = scmp.ne.s32.totalorder %s132, %s133
    %p142 = scmp.eq.s32.totalorder %s17, 0
    %p143 = por %p141, %p142
    %p144 = scmp.ne.s32.totalorder %s132, %s133
    %p145 = scmp.eq.s32.totalorder %s18, 1
    %p146 = por %p144, %p145
    %p148 = scmp.ne.s32.totalorder %s133, %s147
    %p149 = scmp.eq.s32.totalorder %s18, 0
    %p150 = por %p148, %p149
    %s151 = ssub.s32 %s12, %s19
    %p152 = scmp.eq.s32.totalorder %s151, 0
    %s154 = sadd.s32 %s153, 1
    %s155 = scalar_select %p152, %s153, %s154
    %p158 = pneg %p152
    %p159 = scmp.eq.s32.totalorder %s12, 1
    %p160 = por %p158, %p159
    %p161 = scmp.ne.s32.totalorder %s153, %s156
    %p162 = scmp.eq.s32.totalorder %s12, 0
    %p163 = por %p161, %p162
    %p164 = scmp.ne.s32.totalorder %s153, %s156
    %p165 = scmp.eq.s32.totalorder %s17, 1
    %p166 = por %p164, %p165
    %p167 = scmp.ne.s32.totalorder %s156, %s157
    %p168 = scmp.eq.s32.totalorder %s17, 0
    %p169 = por %p167, %p168
    %p170 = scmp.ne.s32.totalorder %s156, %s157
    %p171 = scmp.eq.s32.totalorder %s18, 1
    %p172 = por %p170, %p171
    %p174 = scmp.ne.s32.totalorder %s157, %s173
    %p175 = scmp.eq.s32.totalorder %s18, 0
    %p176 = por %p174, %p175
    %p177 = scmp.le.s32.totalorder 1, %s12
    %p178 = scmp.lt.s32.totalorder %s12, 3
    %p179 = pnand %p177, %p178
    %p180 = pneg %p179
    // Predicated region
    $region9: #{block_forward.1} parent=5 // pred_check
      _
    $region10: #{block_forward.1} parent=5 // pred_check_branch
      %182 = sbr.rel (%p179) target = $region12
    $region11: #{block_forward.1} parent=5 // pred_region
      %s183 = ssub.s32 %s12, 1
      // Predicated region
      $region13: #{block_forward.1} parent=11 // pred_check
        %p184 = pneg %p59
      $region14: #{block_forward.1} parent=11 // pred_check_branch
        %186 = sbr.rel (%p184) target = $region16
      $region15: #{block_forward.1} parent=11 // pred_region
        _
      $region16: #{block_forward.1} parent=11 // pred_fallthru
        _
      // Predicated region
      $region17: #{block_forward.1} parent=11 // pred_check
        %p187 = pneg %p80
      $region18: #{block_forward.1} parent=11 // pred_check_branch
        %189 = sbr.rel (%p187) target = $region20
      $region19: #{block_forward.1} parent=11 // pred_region
        _
      $region20: #{block_forward.1} parent=11 // pred_fallthru
        _
      // Predicated region
      $region21: #{block_forward.1} parent=11 // pred_check
        %p190 = pneg %p101
      $region22: #{block_forward.1} parent=11 // pred_check_branch
        %192 = sbr.rel (%p190) target = $region24
      $region23: #{block_forward.1} parent=11 // pred_region
        _
      $region24: #{block_forward.1} parent=11 // pred_fallthru
        _
      // Predicated region
      $region25: #{block_forward.1} parent=11 // pred_check
        %p193 = pneg %p122
      $region26: #{block_forward.1} parent=11 // pred_check_branch
        %195 = sbr.rel (%p193) target = $region28
      $region27: #{block_forward.1} parent=11 // pred_region
        _
      $region28: #{block_forward.1} parent=11 // pred_fallthru
        _
      // Predicated region
      $region29: #{block_forward.1} parent=11 // pred_check
        %p196 = pneg %p143
      $region30: #{block_forward.1} parent=11 // pred_check_branch
        %198 = sbr.rel (%p196) target = $region32
      $region31: #{block_forward.1} parent=11 // pred_region
        _
      $region32: #{block_forward.1} parent=11 // pred_fallthru
        _
    $region12: #{block_forward.1} parent=5 // pred_fallthru
      _
    %p199 = scmp.lt.s32.totalorder %s12, 2
    // Predicated region
    $region33: #{block_forward.1} parent=5 // pred_check
      %p200 = pneg %p199
    $region34: #{block_forward.1} parent=5 // pred_check_branch
      %202 = sbr.rel (%p200) target = $region36
    $region35: #{block_forward.1} parent=5 // pred_region
      // Predicated region
      $region37: #{block_forward.1} parent=35 // pred_check
        %p203 = pneg %p32
      $region38: #{block_forward.1} parent=35 // pred_check_branch
        %205 = sbr.rel (%p203) target = $region40
      $region39: #{block_forward.1} parent=35 // pred_region
        %p206 = scmp.lt.s32.totalorder %s12, 1
        %s207 = scalar_select %p206, %s12, 1
        %s208 = smul.addr %s207, 4
        %s209 = smul.addr %s208, 8
        %s210 = scalar_lea.vmem %s0, %s209
      $region40: #{block_forward.1} parent=35 // pred_fallthru
        _
    $region36: #{block_forward.1} parent=5 // pred_fallthru
      _
    %p211 = scmp.le.s32.totalorder 1, %s12
    %p212 = scmp.lt.s32.totalorder %s12, 3
    %p213 = pnand %p211, %p212
    %p214 = pneg %p213
    // Predicated region
    $region41: #{block_forward.1} parent=5 // pred_check
      _
    $region42: #{block_forward.1} parent=5 // pred_check_branch
      %216 = sbr.rel (%p213) target = $region44
    $region43: #{block_forward.1} parent=5 // pred_region
      %s217 = ssub.s32 %s12, 1
      %p218 = scmp.lt.s32.totalorder %s17, 1
      %s219 = scalar_select %p218, %s17, 1
      %s220 = smul.addr %s219, 4
      %s221 = smul.addr %s220, 8
      %s222 = scalar_lea.vmem %s0, %s221
      %p223 = pneg %p38
      %p224 = pneg %p35
      %p225 = pneg %p59
      %p226 = pneg %p56
      %p227 = pneg %p80
      %p228 = pneg %p77
      %p229 = pneg %p101
      %p230 = pneg %p98
      %p231 = pneg %p122
      %p232 = pneg %p119
      %p233 = pneg %p143
      %p234 = pneg %p140
      %p235 = pneg %p169
      %p236 = pneg %p166
      %p237 = scmp.lt.s32.totalorder %s17, 1
      %s238 = scalar_select %p237, %s17, 1
      %s239 = smul.addr %s238, 8
      %s240 = smul.addr %s239, 8
      %s241 = scalar_lea.vmem %s6, %s240
      %p242 = scmp.lt.s32.totalorder %s17, 1
      %s243 = scalar_select %p242, %s17, 1
      %s244 = smul.addr %s243, 4
      %s245 = smul.addr %s244, 8
      %s246 = scalar_lea.vmem %s0, %s245
      %p247 = scmp.lt.s32.totalorder %s17, 1
      %s248 = scalar_select %p247, %s17, 1
      %s249 = smul.addr %s248, 8
      %s250 = smul.addr %s249, 8
      %s251 = scalar_lea.vmem %s6, %s250
      %v253 = vld [vmem:[%s246] sm:$0xff]
      %v254 = vld [vmem:[%s246 + $0x8] sm:$0xff]
      %v255 = vld [vmem:[%s246 + $0x10] sm:$0xff]
      %v256 = vld [vmem:[%s246 + $0x18] sm:$0xff]
      %v257 = vadd.f32 %v253, %v254
      %258 = vadd.xlane.f32.xlu0 %v257
      %v259 = vpop.xlane.xlu0 %258
      %v260 = vadd.f32 %v255, %v256
      %261 = vadd.xlane.f32.xlu0 %v260
      %v262 = vpop.xlane.xlu0 %261
      %vm263 = vcmask 1043456
      %v264 = vsel %vm263, %v259, 0.0
      %v265 = vrot.slane %v264, 4
      %v266 = vadd.f32 %v264, %v265
      %v267 = vrot.slane %v266, 2
      %v268 = vadd.f32 %v266, %v267
      %v269 = vrot.slane %v268, 1
      %v270 = vadd.f32 %v268, %v269
      %v272 = vrot.slane %v259, 4
      %v274 = vsel %vm263, %v272, 0.0
      %v275 = vrot.slane %v274, 4
      %v276 = vadd.f32 %v274, %v275
      %v277 = vrot.slane %v276, 2
      %v278 = vadd.f32 %v276, %v277
      %v279 = vrot.slane %v278, 1
      %v280 = vadd.f32 %v278, %v279
      %v281 = vsel %vm263, %v262, 0.0
      %v282 = vrot.slane %v281, 4
      %v283 = vadd.f32 %v281, %v282
      %v284 = vrot.slane %v283, 2
      %v285 = vadd.f32 %v283, %v284
      %v286 = vrot.slane %v285, 1
      %v287 = vadd.f32 %v285, %v286
      %v289 = vrot.slane %v262, 4
      %v291 = vsel %vm263, %v289, 0.0
      %v292 = vrot.slane %v291, 4
      %v293 = vadd.f32 %v291, %v292
      %v294 = vrot.slane %v293, 2
      %v295 = vadd.f32 %v293, %v294
      %v296 = vrot.slane %v295, 1
      %v297 = vadd.f32 %v295, %v296
      %v298 = vsel %vm263, %v270, %v280
      %v299 = vsel %vm263, %v287, %v297
      %v300 = vmul.f32 %v298, 0.0009765625
      %v301 = vmul.f32 %v299, 0.0009765625
      %303 = vset.pattern.permute.xlu0 0
      %304 = vperm.xlu0 %303, %v300
      %v305 = vpop.permute.xlu0 %304
      %308 = vset.pattern.permute.xlu0 0
      %309 = vperm.xlu0 %308, %v301
      %v310 = vpop.permute.xlu0 %309
      %v312 = vsub.f32 %v253, %v305
      %v313 = vsub.f32 %v254, %v305
      %v314 = vsub.f32 %v255, %v310
      %v315 = vsub.f32 %v256, %v310
      %v316 = vmul.f32 %v312, %v312
      %v317 = vmul.f32 %v313, %v313
      %v318 = vmul.f32 %v314, %v314
      %v319 = vmul.f32 %v315, %v315
      %v320 = vadd.f32 %v316, %v317
      %321 = vadd.xlane.f32.xlu0 %v320
      %v322 = vpop.xlane.xlu0 %321
      %v323 = vadd.f32 %v318, %v319
      %324 = vadd.xlane.f32.xlu0 %v323
      %v325 = vpop.xlane.xlu0 %324
      %v326 = vsel %vm263, %v322, 0.0
      %v327 = vrot.slane %v326, 4
      %v328 = vadd.f32 %v326, %v327
      %v329 = vrot.slane %v328, 2
      %v330 = vadd.f32 %v328, %v329
      %v331 = vrot.slane %v330, 1
      %v332 = vadd.f32 %v330, %v331
      %v334 = vrot.slane %v322, 4
      %v336 = vsel %vm263, %v334, 0.0
      %v337 = vrot.slane %v336, 4
      %v338 = vadd.f32 %v336, %v337
      %v339 = vrot.slane %v338, 2
      %v340 = vadd.f32 %v338, %v339
      %v341 = vrot.slane %v340, 1
      %v342 = vadd.f32 %v340, %v341
      %v343 = vsel %vm263, %v325, 0.0
      %v344 = vrot.slane %v343, 4
      %v345 = vadd.f32 %v343, %v344
      %v346 = vrot.slane %v345, 2
      %v347 = vadd.f32 %v345, %v346
      %v348 = vrot.slane %v347, 1
      %v349 = vadd.f32 %v347, %v348
      %v351 = vrot.slane %v325, 4
      %v353 = vsel %vm263, %v351, 0.0
      %v354 = vrot.slane %v353, 4
      %v355 = vadd.f32 %v353, %v354
      %v356 = vrot.slane %v355, 2
      %v357 = vadd.f32 %v355, %v356
      %v358 = vrot.slane %v357, 1
      %v359 = vadd.f32 %v357, %v358
      %v360 = vsel %vm263, %v332, %v342
      %v361 = vsel %vm263, %v349, %v359
      %v362 = vmul.f32 %v360, 0.0009765625
      %v363 = vmul.f32 %v361, 0.0009765625
      %v364 = vadd.f32 %v362, 1e-05
      %v365 = vadd.f32 %v363, 1e-05
      %v366 = vrsqrt.pop %v364
      %v367 = vrsqrt.pop %v365
      %369 = vset.pattern.permute.xlu0 0
      %370 = vperm.xlu0 %369, %v366
      %v371 = vpop.permute.xlu0 %370
      %374 = vset.pattern.permute.xlu0 0
      %375 = vperm.xlu0 %374, %v367
      %v376 = vpop.permute.xlu0 %375
      %v378 = vmul.f32 %v312, %v371
      %v379 = vmul.f32 %v313, %v371
      %v380 = vmul.f32 %v314, %v376
      %v381 = vmul.f32 %v315, %v376
      %v382 = vld [vmem:[%s1] sm:$0xff]
      %v383 = vld [vmem:[%s1 + $0x8] sm:$0xff]
      %385 = vset.pattern.permute.xlu0 0
      %386 = vperm.xlu0 %385, %v382
      %v387 = vpop.permute.xlu0 %386
      %390 = vset.pattern.permute.xlu0 0
      %391 = vperm.xlu0 %390, %v383
      %v392 = vpop.permute.xlu0 %391
      %v394 = vmul.f32 %v378, %v387
      %v395 = vmul.f32 %v379, %v387
      %v396 = vmul.f32 %v380, %v392
      %v397 = vmul.f32 %v381, %v392
      %v398 = vld [vmem:[%s2] sm:$0xff]
      %v399 = vld [vmem:[%s2 + $0x8] sm:$0xff]
      %401 = vset.pattern.permute.xlu0 0
      %402 = vperm.xlu0 %401, %v398
      %v403 = vpop.permute.xlu0 %402
      %406 = vset.pattern.permute.xlu0 0
      %407 = vperm.xlu0 %406, %v399
      %v408 = vpop.permute.xlu0 %407
      %v410 = vadd.f32 %v394, %v403
      %v411 = vadd.f32 %v395, %v403
      %v412 = vadd.f32 %v396, %v408
      %v413 = vadd.f32 %v397, %v408
      %v414 = vxor.u32 %v410, 2147483648
      %v415 = vxor.u32 %v411, 2147483648
      %v416 = vxor.u32 %v412, 2147483648
      %v417 = vxor.u32 %v413, 2147483648
      %v418 = vmul.f32 %v414, 1.442695
      %v419 = vpow.pop %v418
      %v420 = vmul.f32 %v415, 1.442695
      %v421 = vpow.pop %v420
      %v422 = vmul.f32 %v416, 1.442695
      %v423 = vpow.pop %v422
      %v424 = vmul.f32 %v417, 1.442695
      %v425 = vpow.pop %v424
      %v426 = vadd.f32 %v419, 1.0
      %v427 = vadd.f32 %v421, 1.0
      %v428 = vadd.f32 %v423, 1.0
      %v429 = vadd.f32 %v425, 1.0
      %v430 = vrcp.pop %v426
      %v431 = vmul.f32 1.0, %v430
      %v432 = vrcp.pop %v427
      %v433 = vmul.f32 1.0, %v432
      %v434 = vrcp.pop %v428
      %v435 = vmul.f32 1.0, %v434
      %v436 = vrcp.pop %v429
      %v437 = vmul.f32 1.0, %v436
      %v438 = vmul.f32 %v410, %v431
      %v439 = vmul.f32 %v411, %v433
      %v440 = vmul.f32 %v412, %v435
      %v441 = vmul.f32 %v413, %v437
      %v442 = vpack.c.bf16 %v440, %v438
      %v443 = vpack.c.bf16 %v441, %v439
      %445 = vrot.lane.b32.xlu0 %v443, 73
      %v446 = vpop.permute.xlu0 %445
      %448 = vrot.lane.b32.xlu0 %v442, 73
      %v449 = vpop.permute.xlu0 %448
      %vm450 = vcmask 596992
      %v451 = vsel %vm450, %v449, %v446
      %vm453 = vcmask 596992
      %v456 = vsel %vm453, %v446, %v449
      %v458 = vld [vmem:[%s5] sm:$0x11]
      %v460 = vunpack.c.l.b16 %v458
      %v461 = vunpack.c.h.b16 %v458
      %v462 = vpack.c.b16 %v460, %v460
      %v463 = vpack.c.b16 %v461, %v461
      %v465 = vpack.i.b16 %v462, %v462
      %v467 = vlaneseq
      %v468 = vshrl.u32 %v467, 7
      %v469 = vsub.s32 0, %v468
      %v470 = vrot.slane %v465, %v469
      %v472 = vpack.i.b16 %v463, %v463
      %v474 = vlaneseq
      %v475 = vshrl.u32 %v474, 7
      %v476 = vsub.s32 0, %v475
      %v477 = vrot.slane %v472, %v476
      %v478 = vmul.bf16 %v456, %v470
      %v479 = vmul.bf16 %v451, %v477
      %480 = vrot.lane.b32.xlu0 %v443, 72
      %v481 = vpop.permute.xlu0 %480
      %482 = vrot.lane.b32.xlu0 %v442, 72
      %v483 = vpop.permute.xlu0 %482
      %vm484 = vcmask 588800
      %v485 = vsel %vm484, %v483, %v481
      %vm487 = vcmask 588800
      %v490 = vsel %vm487, %v481, %v483
      %v492 = vshrl.u32 %v462, 16
      %v493 = vpack.i.b16 %v492, %v492
      %v495 = vlaneseq
      %v496 = vshrl.u32 %v495, 7
      %v497 = vsub.s32 0, %v496
      %v498 = vrot.slane %v493, %v497
      %v499 = vshrl.u32 %v463, 16
      %v500 = vpack.i.b16 %v499, %v499
      %v502 = vlaneseq
      %v503 = vshrl.u32 %v502, 7
      %v504 = vsub.s32 0, %v503
      %v505 = vrot.slane %v500, %v504
      %v506 = vmul.bf16 %v490, %v498
      %v507 = vmul.bf16 %v485, %v505
      %508 = vrot.lane.b32.xlu0 %v443, 71
      %v509 = vpop.permute.xlu0 %508
      %510 = vrot.lane.b32.xlu0 %v442, 71
      %v511 = vpop.permute.xlu0 %510
      %vm512 = vcmask 580608
      %v513 = vsel %vm512, %v511, %v509
      %vm515 = vcmask 580608
      %v518 = vsel %vm515, %v509, %v511
      %v520 = vld [vmem:[%s5] sm:$0x22]
      %v522 = vunpack.c.l.b16 %v520
      %v523 = vunpack.c.h.b16 %v520
      %v524 = vpack.c.b16 %v522, %v522
      %v525 = vpack.c.b16 %v523, %v523
      %v527 = vpack.i.b16 %v524, %v524
      %v529 = vlaneseq
      %v530 = vshrl.u32 %v529, 7
      %v531 = vsub.s32 1, %v530
      %v532 = vrot.slane %v527, %v531
      %v534 = vpack.i.b16 %v525, %v525
      %v536 = vlaneseq
      %v537 = vshrl.u32 %v536, 7
      %v538 = vsub.s32 1, %v537
      %v539 = vrot.slane %v534, %v538
      %v540 = vmul.bf16 %v518, %v532
      %v541 = vmul.bf16 %v513, %v539
      %542 = vrot.lane.b32.xlu0 %v443, 65
      %v543 = vpop.permute.xlu0 %542
      %544 = vrot.lane.b32.xlu0 %v442, 65
      %v545 = vpop.permute.xlu0 %544
      %vm546 = vcmask 531456
      %v547 = vsel %vm546, %v545, %v543
      %vm549 = vcmask 531456
      %v552 = vsel %vm549, %v543, %v545
      %v554 = vshrl.u32 %v524, 16
      %v555 = vpack.i.b16 %v554, %v554
      %v557 = vlaneseq
      %v558 = vshrl.u32 %v557, 7
      %v559 = vsub.s32 1, %v558
      %v560 = vrot.slane %v555, %v559
      %v561 = vshrl.u32 %v525, 16
      %v562 = vpack.i.b16 %v561, %v561
      %v564 = vlaneseq
      %v565 = vshrl.u32 %v564, 7
      %v566 = vsub.s32 1, %v565
      %v567 = vrot.slane %v562, %v566
      %v568 = vmul.bf16 %v552, %v560
      %v569 = vmul.bf16 %v547, %v567
      %570 = vrot.lane.b32.xlu0 %v443, 64
      %v571 = vpop.permute.xlu0 %570
      %572 = vrot.lane.b32.xlu0 %v442, 64
      %v573 = vpop.permute.xlu0 %572
      %vm574 = vcmask 523264
      %v575 = vsel %vm574, %v573, %v571
      %vm577 = vcmask 523264
      %v580 = vsel %vm577, %v571, %v573
      %v582 = vld [vmem:[%s5] sm:$0x44]
      %v584 = vunpack.c.l.b16 %v582
      %v585 = vunpack.c.h.b16 %v582
      %v586 = vpack.c.b16 %v584, %v584
      %v587 = vpack.c.b16 %v585, %v585
      %v589 = vpack.i.b16 %v586, %v586
      %v591 = vlaneseq
      %v592 = vshrl.u32 %v591, 7
      %v593 = vsub.s32 2, %v592
      %v594 = vrot.slane %v589, %v593
      %v596 = vpack.i.b16 %v587, %v587
      %v598 = vlaneseq
      %v599 = vshrl.u32 %v598, 7
      %v600 = vsub.s32 2, %v599
      %v601 = vrot.slane %v596, %v600
      %v602 = vmul.bf16 %v580, %v594
      %v603 = vmul.bf16 %v575, %v601
      %604 = vrot.lane.b32.xlu0 %v443, 63
      %v605 = vpop.permute.xlu0 %604
      %606 = vrot.lane.b32.xlu0 %v442, 63
      %v607 = vpop.permute.xlu0 %606
      %vm608 = vcmask 515072
      %v609 = vsel %vm608, %v607, %v605
      %vm611 = vcmask 515072
      %v614 = vsel %vm611, %v605, %v607
      %v616 = vshrl.u32 %v586, 16
      %v617 = vpack.i.b16 %v616, %v616
      %v619 = vlaneseq
      %v620 = vshrl.u32 %v619, 7
      %v621 = vsub.s32 2, %v620
      %v622 = vrot.slane %v617, %v621
      %v623 = vshrl.u32 %v587, 16
      %v624 = vpack.i.b16 %v623, %v623
      %v626 = vlaneseq
      %v627 = vshrl.u32 %v626, 7
      %v628 = vsub.s32 2, %v627
      %v629 = vrot.slane %v624, %v628
      %v630 = vmul.bf16 %v614, %v622
      %v631 = vmul.bf16 %v609, %v629
      %632 = vrot.lane.b32.xlu0 %v443, 57
      %v633 = vpop.permute.xlu0 %632
      %634 = vrot.lane.b32.xlu0 %v442, 57
      %v635 = vpop.permute.xlu0 %634
      %vm636 = vcmask 465920
      %v637 = vsel %vm636, %v635, %v633
      %vm639 = vcmask 465920
      %v642 = vsel %vm639, %v633, %v635
      %v644 = vld [vmem:[%s5] sm:$0x88]
      %v646 = vunpack.c.l.b16 %v644
      %v647 = vunpack.c.h.b16 %v644
      %v648 = vpack.c.b16 %v646, %v646
      %v649 = vpack.c.b16 %v647, %v647
      %v651 = vpack.i.b16 %v648, %v648
      %v653 = vlaneseq
      %v654 = vshrl.u32 %v653, 7
      %v655 = vsub.s32 3, %v654
      %v656 = vrot.slane %v651, %v655
      %v658 = vpack.i.b16 %v649, %v649
      %v660 = vlaneseq
      %v661 = vshrl.u32 %v660, 7
      %v662 = vsub.s32 3, %v661
      %v663 = vrot.slane %v658, %v662
      %v664 = vmul.bf16 %v642, %v656
      %v665 = vmul.bf16 %v637, %v663
      %666 = vrot.lane.b32.xlu0 %v443, 56
      %v667 = vpop.permute.xlu0 %666
      %668 = vrot.lane.b32.xlu0 %v442, 56
      %v669 = vpop.permute.xlu0 %668
      %vm670 = vcmask 457728
      %v671 = vsel %vm670, %v669, %v667
      %vm673 = vcmask 457728
      %v676 = vsel %vm673, %v667, %v669
      %v678 = vshrl.u32 %v648, 16
      %v679 = vpack.i.b16 %v678, %v678
      %v681 = vlaneseq
      %v682 = vshrl.u32 %v681, 7
      %v683 = vsub.s32 3, %v682
      %v684 = vrot.slane %v679, %v683
      %v685 = vshrl.u32 %v649, 16
      %v686 = vpack.i.b16 %v685, %v685
      %v688 = vlaneseq
      %v689 = vshrl.u32 %v688, 7
      %v690 = vsub.s32 3, %v689
      %v691 = vrot.slane %v686, %v690
      %v692 = vmul.bf16 %v676, %v684
      %v693 = vmul.bf16 %v671, %v691
      %694 = vrot.lane.b32.xlu0 %v443, 55
      %v695 = vpop.permute.xlu0 %694
      %696 = vrot.lane.b32.xlu0 %v442, 55
      %v697 = vpop.permute.xlu0 %696
      %vm698 = vcmask 449536
      %v699 = vsel %vm698, %v697, %v695
      %vm701 = vcmask 449536
      %v704 = vsel %vm701, %v695, %v697
      %v706 = vld [vmem:[%s5 + $0x8] sm:$0x11]
      %v708 = vunpack.c.l.b16 %v706
      %v709 = vunpack.c.h.b16 %v706
      %v710 = vpack.c.b16 %v708, %v708
      %v711 = vpack.c.b16 %v709, %v709
      %v713 = vpack.i.b16 %v710, %v710
      %v715 = vlaneseq
      %v716 = vshrl.u32 %v715, 7
      %v717 = vsub.s32 0, %v716
      %v718 = vrot.slane %v713, %v717
      %v720 = vpack.i.b16 %v711, %v711
      %v722 = vlaneseq
      %v723 = vshrl.u32 %v722, 7
      %v724 = vsub.s32 0, %v723
      %v725 = vrot.slane %v720, %v724
      %v726 = vmul.bf16 %v704, %v718
      %v727 = vmul.bf16 %v699, %v725
      %v728 = vld [vmem:[%s3] sm:$0xff]
      %v729 = vld [vmem:[%s3 + $0x8] sm:$0xff]
      %v730 = vld [vmem:[%s3 + $0x10] sm:$0xff]
      %v731 = vld [vmem:[%s3 + $0x18] sm:$0xff]
      %732 = vrot.lane.b32.xlu0 %v443, 9
      %v733 = vpop.permute.xlu0 %732
      %734 = vrot.lane.b32.xlu0 %v442, 9
      %v735 = vpop.permute.xlu0 %734
      %vm736 = vcmask 72704
      %v737 = vsel %vm736, %v735, %v733
      %vm739 = vcmask 72704
      %v742 = vsel %vm739, %v733, %v735
      %v744 = vshrl.u32 %v710, 16
      %v745 = vpack.i.b16 %v744, %v744
      %v747 = vlaneseq
      %v748 = vshrl.u32 %v747, 7
      %v749 = vsub.s32 0, %v748
      %v750 = vrot.slane %v745, %v749
      %v751 = vshrl.u32 %v711, 16
      %v752 = vpack.i.b16 %v751, %v751
      %v754 = vlaneseq
      %v755 = vshrl.u32 %v754, 7
      %v756 = vsub.s32 0, %v755
      %v757 = vrot.slane %v752, %v756
      %v758 = vmul.bf16 %v742, %v750
      %v759 = vmul.bf16 %v737, %v757
      %760 = vrot.lane.b32.xlu0 %v443, 8
      %v761 = vpop.permute.xlu0 %760
      %762 = vrot.lane.b32.xlu0 %v442, 8
      %v763 = vpop.permute.xlu0 %762
      %vm764 = vcmask 64512
      %v765 = vsel %vm764, %v763, %v761
      %vm767 = vcmask 64512
      %v770 = vsel %vm767, %v761, %v763
      %v772 = vld [vmem:[%s5 + $0x8] sm:$0x22]
      %v774 = vunpack.c.l.b16 %v772
      %v775 = vunpack.c.h.b16 %v772
      %v776 = vpack.c.b16 %v774, %v774
      %v777 = vpack.c.b16 %v775, %v775
      %v779 = vpack.i.b16 %v776, %v776
      %v781 = vlaneseq
      %v782 = vshrl.u32 %v781, 7
      %v783 = vsub.s32 1, %v782
      %v784 = vrot.slane %v779, %v783
      %v786 = vpack.i.b16 %v777, %v777
      %v788 = vlaneseq
      %v789 = vshrl.u32 %v788, 7
      %v790 = vsub.s32 1, %v789
      %v791 = vrot.slane %v786, %v790
      %v792 = vmul.bf16 %v770, %v784
      %v793 = vmul.bf16 %v765, %v791
      %794 = vrot.lane.b32.xlu0 %v443, 7
      %v795 = vpop.permute.xlu0 %794
      %796 = vrot.lane.b32.xlu0 %v442, 7
      %v797 = vpop.permute.xlu0 %796
      %vm798 = vcmask 56320
      %v799 = vsel %vm798, %v797, %v795
      %vm801 = vcmask 56320
      %v804 = vsel %vm801, %v795, %v797
      %v806 = vshrl.u32 %v776, 16
      %v807 = vpack.i.b16 %v806, %v806
      %v809 = vlaneseq
      %v810 = vshrl.u32 %v809, 7
      %v811 = vsub.s32 1, %v810
      %v812 = vrot.slane %v807, %v811
      %v813 = vshrl.u32 %v777, 16
      %v814 = vpack.i.b16 %v813, %v813
      %v816 = vlaneseq
      %v817 = vshrl.u32 %v816, 7
      %v818 = vsub.s32 1, %v817
      %v819 = vrot.slane %v814, %v818
      %v820 = vmul.bf16 %v804, %v812
      %v821 = vmul.bf16 %v799, %v819
      %822 = vrot.lane.b32.xlu0 %v443, 1
      %v823 = vpop.permute.xlu0 %822
      %824 = vrot.lane.b32.xlu0 %v442, 1
      %v825 = vpop.permute.xlu0 %824
      %vm826 = vcmask 7168
      %v827 = vsel %vm826, %v825, %v823
      %vm829 = vcmask 7168
      %v832 = vsel %vm829, %v823, %v825
      %v834 = vld [vmem:[%s5 + $0x8] sm:$0x44]
      %v836 = vunpack.c.l.b16 %v834
      %v837 = vunpack.c.h.b16 %v834
      %v838 = vpack.c.b16 %v836, %v836
      %v839 = vpack.c.b16 %v837, %v837
      %v841 = vpack.i.b16 %v838, %v838
      %v843 = vlaneseq
      %v844 = vshrl.u32 %v843, 7
      %v845 = vsub.s32 2, %v844
      %v846 = vrot.slane %v841, %v845
      %v848 = vpack.i.b16 %v839, %v839
      %v850 = vlaneseq
      %v851 = vshrl.u32 %v850, 7
      %v852 = vsub.s32 2, %v851
      %v853 = vrot.slane %v848, %v852
      %v854 = vmul.bf16 %v832, %v846
      %v855 = vmul.bf16 %v827, %v853
      %v856 = vshrl.u32 %v838, 16
      %v857 = vpack.i.b16 %v856, %v856
      %v859 = vlaneseq
      %v860 = vshrl.u32 %v859, 7
      %v861 = vsub.s32 2, %v860
      %v862 = vrot.slane %v857, %v861
      %v863 = vshrl.u32 %v839, 16
      %v864 = vpack.i.b16 %v863, %v863
      %v866 = vlaneseq
      %v867 = vshrl.u32 %v866, 7
      %v868 = vsub.s32 2, %v867
      %v869 = vrot.slane %v864, %v868
      %v870 = vmul.bf16 %v442, %v862
      %v871 = vmul.bf16 %v443, %v869
      %872 = vrot.lane.b32.xlu0 %v442, 127
      %v873 = vpop.permute.xlu0 %872
      %874 = vrot.lane.b32.xlu0 %v443, 127
      %v875 = vpop.permute.xlu0 %874
      %vm876 = vcmask 1039360
      %v877 = vsel %vm876, %v873, %v875
      %vm879 = vcmask 1039360
      %v882 = vsel %vm879, %v875, %v873
      %v884 = vld [vmem:[%s5 + $0x8] sm:$0x88]
      %v886 = vunpack.c.l.b16 %v884
      %v887 = vunpack.c.h.b16 %v884
      %v888 = vpack.c.b16 %v886, %v886
      %v889 = vpack.c.b16 %v887, %v887
      %v891 = vpack.i.b16 %v888, %v888
      %v893 = vlaneseq
      %v894 = vshrl.u32 %v893, 7
      %v895 = vsub.s32 3, %v894
      %v896 = vrot.slane %v891, %v895
      %v898 = vpack.i.b16 %v889, %v889
      %v900 = vlaneseq
      %v901 = vshrl.u32 %v900, 7
      %v902 = vsub.s32 3, %v901
      %v903 = vrot.slane %v898, %v902
      %v904 = vmul.bf16 %v877, %v896
      %v905 = vmul.bf16 %v882, %v903
      %906 = vrot.lane.b32.xlu0 %v442, 121
      %v907 = vpop.permute.xlu0 %906
      %908 = vrot.lane.b32.xlu0 %v443, 121
      %v909 = vpop.permute.xlu0 %908
      %vm910 = vcmask 990208
      %v911 = vsel %vm910, %v907, %v909
      %vm913 = vcmask 990208
      %v916 = vsel %vm913, %v909, %v907
      %v918 = vshrl.u32 %v888, 16
      %v919 = vpack.i.b16 %v918, %v918
      %v921 = vlaneseq
      %v922 = vshrl.u32 %v921, 7
      %v923 = vsub.s32 3, %v922
      %v924 = vrot.slane %v919, %v923
      %v925 = vshrl.u32 %v889, 16
      %v926 = vpack.i.b16 %v925, %v925
      %v928 = vlaneseq
      %v929 = vshrl.u32 %v928, 7
      %v930 = vsub.s32 3, %v929
      %v931 = vrot.slane %v926, %v930
      %v932 = vmul.bf16 %v911, %v924
      %v933 = vmul.bf16 %v916, %v931
      %934 = vrot.lane.b32.xlu0 %v442, 120
      %v935 = vpop.permute.xlu0 %934
      %936 = vrot.lane.b32.xlu0 %v443, 120
      %v937 = vpop.permute.xlu0 %936
      %vm938 = vcmask 982016
      %v939 = vsel %vm938, %v935, %v937
      %vm941 = vcmask 982016
      %v944 = vsel %vm941, %v937, %v935
      %v946 = vld [vmem:[%s5 + $0x10] sm:$0x11]
      %v948 = vunpack.c.l.b16 %v946
      %v949 = vunpack.c.h.b16 %v946
      %v950 = vpack.c.b16 %v948, %v948
      %v951 = vpack.c.b16 %v949, %v949
      %v953 = vpack.i.b16 %v950, %v950
      %v955 = vlaneseq
      %v956 = vshrl.u32 %v955, 7
      %v957 = vsub.s32 0, %v956
      %v958 = vrot.slane %v953, %v957
      %v960 = vpack.i.b16 %v951, %v951
      %v962 = vlaneseq
      %v963 = vshrl.u32 %v962, 7
      %v964 = vsub.s32 0, %v963
      %v965 = vrot.slane %v960, %v964
      %v966 = vmul.bf16 %v939, %v958
      %v967 = vmul.bf16 %v944, %v965
      %968 = vrot.lane.b32.xlu0 %v442, 119
      %v969 = vpop.permute.xlu0 %968
      %970 = vrot.lane.b32.xlu0 %v443, 119
      %v971 = vpop.permute.xlu0 %970
      %vm972 = vcmask 973824
      %v973 = vsel %vm972, %v969, %v971
      %vm975 = vcmask 973824
      %v978 = vsel %vm975, %v971, %v969
      %v980 = vshrl.u32 %v950, 16
      %v981 = vpack.i.b16 %v980, %v980
      %v983 = vlaneseq
      %v984 = vshrl.u32 %v983, 7
      %v985 = vsub.s32 0, %v984
      %v986 = vrot.slane %v981, %v985
      %v987 = vshrl.u32 %v951, 16
      %v988 = vpack.i.b16 %v987, %v987
      %v990 = vlaneseq
      %v991 = vshrl.u32 %v990, 7
      %v992 = vsub.s32 0, %v991
      %v993 = vrot.slane %v988, %v992
      %v994 = vmul.bf16 %v973, %v986
      %v995 = vmul.bf16 %v978, %v993
      %s996 = scalar_lea.vmem %s3, 32
      %v997 = vld [vmem:[%s996] sm:$0xff]
      %v998 = vld [vmem:[%s996 + $0x8] sm:$0xff]
      %v999 = vld [vmem:[%s996 + $0x10] sm:$0xff]
      %v1000 = vld [vmem:[%s996 + $0x18] sm:$0xff]
      %v1005 = vunpack.c.l.b16 %v997
      %v1006 = vunpack.c.h.b16 %v997
      %v1007 = vunpack.c.l.b16 %v998
      %v1008 = vunpack.c.h.b16 %v998
      %v1009 = vunpack.c.l.b16 %v999
      %v1010 = vunpack.c.h.b16 %v999
      %v1011 = vunpack.c.l.b16 %v1000
      %v1012 = vunpack.c.h.b16 %v1000
      %v1013 = vpack.c.b16 %v1007, %v1005
      %v1014 = vpack.c.b16 %v1008, %v1006
      %v1015 = vpack.c.b16 %v1011, %v1009
      %v1016 = vpack.c.b16 %v1012, %v1010
      %vm1019 = vcmask 130048
      %v1021 = vsel %vm1019, %v1014, 0
      %v1024 = vsel %vm1019, %v1016, 0
      %1026 = vmatprep.subr.bf16.mxu0 %v967
      %1027 = vmatpush1.bf16.msra.mxu0 %v966
      %1028 = vmatprep.subr.bf16.mxu0 %v933
      %1029 = vmatpush1.bf16.msra.mxu0 %v932
      %1030 = vmatprep.subr.bf16.mxu0 %v905
      %1031 = vmatpush1.bf16.msra.mxu0 %v904
      %1032 = vmatprep.subr.bf16.mxu0 %v871
      %1033 = vmatpush1.bf16.msra.mxu0 %v870
      %1034 = vmatprep.subr.bf16.mxu0 %v855
      %1035 = vmatpush1.bf16.msra.mxu0 %v854
      %1036 = vmatprep.subr.bf16.mxu0 %v821
      %1037 = vmatpush1.bf16.msra.mxu0 %v820
      %1038 = vmatprep.subr.bf16.mxu0 %v793
      %1039 = vmatpush1.bf16.msra.mxu0 %v792
      %1040 = vmatprep.subr.bf16.mxu0 %v759
      %1041 = vmatpush1.bf16.msra.mxu0 %v758
      %1042 = vmatprep.subr.bf16.mxu0 0
      %1043 = vmatpush2.bf16.msra.mxu0 0
      %1044 = vmatprep.subr.bf16.mxu0 0
      %1045 = vmatpush2.bf16.msra.mxu0 0
      %1046 = vmatprep.subr.bf16.mxu0 0
      %1047 = vmatpush2.bf16.msra.mxu0 0
      %1048 = vmatprep.subr.bf16.mxu0 0
      %1049 = vmatpush2.bf16.msra.mxu0 0
      %1050 = vmatprep.subr.bf16.mxu0 0
      %1051 = vmatpush2.bf16.msra.mxu0 0
      %1052 = vmatprep.subr.bf16.mxu0 0
      %1053 = vmatpush2.bf16.msra.mxu0 0
      %1054 = vmatprep.subr.bf16.mxu0 0
      %1055 = vmatpush2.bf16.msra.mxu0 0
      %1056 = vmatprep.subr.bf16.mxu0 %v995
      %1057 = vmatpush2.bf16.msra.mxu0 %v994
      %1058 = vmatprep.mubr.bf16.mxu0 %v1021
      %1059 = vmatmul.mubr.bf16.gmra.mxu0 %v1013
      %v1060 = vpop.f32.mrf.mxu0
      %v1061 = vadd.f32 0.0, %v1060
      %v1062 = vpop.f32.mrf.mxu0
      %v1063 = vadd.f32 0.0, %v1062
      %v1064 = vpop.f32.mrf.mxu0
      %v1065 = vadd.f32 0.0, %v1064
      %v1066 = vpop.f32.mrf.mxu0
      %v1067 = vadd.f32 0.0, %v1066
      %1068 = vmatprep.mubr.bf16.mxu0 %v1024
      %1069 = vmatmul.mubr.bf16.gmra.mxu0 %v1015
      %v1070 = vpop.f32.mrf.mxu0
      %v1071 = vadd.f32 0.0, %v1070
      %v1072 = vpop.f32.mrf.mxu0
      %v1073 = vadd.f32 0.0, %v1072
      %v1074 = vpop.f32.mrf.mxu0
      %v1075 = vadd.f32 0.0, %v1074
      %v1076 = vpop.f32.mrf.mxu0
      %v1077 = vadd.f32 0.0, %v1076
      %1078 = vdwg.mxu0
      %v1083 = vunpack.c.l.b16 %v728
      %v1084 = vunpack.c.h.b16 %v728
      %v1085 = vunpack.c.l.b16 %v729
      %v1086 = vunpack.c.h.b16 %v729
      %v1087 = vunpack.c.l.b16 %v730
      %v1088 = vunpack.c.h.b16 %v730
      %v1089 = vunpack.c.l.b16 %v731
      %v1090 = vunpack.c.h.b16 %v731
      %v1091 = vpack.c.b16 %v1085, %v1083
      %v1092 = vpack.c.b16 %v1086, %v1084
      %v1093 = vpack.c.b16 %v1089, %v1087
      %v1094 = vpack.c.b16 %v1090, %v1088
      %v1098 = vsel %vm1019, %v1092, 0
      %v1101 = vsel %vm1019, %v1094, 0
      %1103 = vmatprep.subr.bf16.mxu0 %v693
      %1104 = vmatpush1.bf16.msra.mxu0 %v692
      %1105 = vmatprep.subr.bf16.mxu0 %v665
      %1106 = vmatpush1.bf16.msra.mxu0 %v664
      %1107 = vmatprep.subr.bf16.mxu0 %v631
      %1108 = vmatpush1.bf16.msra.mxu0 %v630
      %1109 = vmatprep.subr.bf16.mxu0 %v603
      %1110 = vmatpush1.bf16.msra.mxu0 %v602
      %1111 = vmatprep.subr.bf16.mxu0 %v569
      %1112 = vmatpush1.bf16.msra.mxu0 %v568
      %1113 = vmatprep.subr.bf16.mxu0 %v541
      %1114 = vmatpush1.bf16.msra.mxu0 %v540
      %1115 = vmatprep.subr.bf16.mxu0 %v507
      %1116 = vmatpush1.bf16.msra.mxu0 %v506
      %1117 = vmatprep.subr.bf16.mxu0 %v479
      %1118 = vmatpush1.bf16.msra.mxu0 %v478
      %1119 = vmatprep.subr.bf16.mxu0 0
      %1120 = vmatpush2.bf16.msra.mxu0 0
      %1121 = vmatprep.subr.bf16.mxu0 0
      %1122 = vmatpush2.bf16.msra.mxu0 0
      %1123 = vmatprep.subr.bf16.mxu0 0
      %1124 = vmatpush2.bf16.msra.mxu0 0
      %1125 = vmatprep.subr.bf16.mxu0 0
      %1126 = vmatpush2.bf16.msra.mxu0 0
      %1127 = vmatprep.subr.bf16.mxu0 0
      %1128 = vmatpush2.bf16.msra.mxu0 0
      %1129 = vmatprep.subr.bf16.mxu0 0
      %1130 = vmatpush2.bf16.msra.mxu0 0
      %1131 = vmatprep.subr.bf16.mxu0 0
      %1132 = vmatpush2.bf16.msra.mxu0 0
      %1133 = vmatprep.subr.bf16.mxu0 %v727
      %1134 = vmatpush2.bf16.msra.mxu0 %v726
      %1135 = vmatprep.mubr.bf16.mxu0 %v1098
      %1136 = vmatmul.mubr.bf16.gmra.mxu0 %v1091
      %v1137 = vpop.f32.mrf.mxu0
      %v1138 = vadd.f32 %v1061, %v1137
      %v1139 = vpop.f32.mrf.mxu0
      %v1140 = vadd.f32 %v1063, %v1139
      %v1141 = vpop.f32.mrf.mxu0
      %v1142 = vadd.f32 %v1065, %v1141
      %v1143 = vpop.f32.mrf.mxu0
      %v1144 = vadd.f32 %v1067, %v1143
      %1145 = vmatprep.mubr.bf16.mxu0 %v1101
      %1146 = vmatmul.mubr.bf16.gmra.mxu0 %v1093
      %v1147 = vpop.f32.mrf.mxu0
      %v1148 = vadd.f32 %v1071, %v1147
      %v1149 = vpop.f32.mrf.mxu0
      %v1150 = vadd.f32 %v1073, %v1149
      %v1151 = vpop.f32.mrf.mxu0
      %v1152 = vadd.f32 %v1075, %v1151
      %v1153 = vpop.f32.mrf.mxu0
      %v1154 = vadd.f32 %v1077, %v1153
      %1155 = vdwg.mxu0
      %v1156 = vld [vmem:[%s5 + $0x10] sm:$0x22]
      %v1158 = vunpack.c.l.b16 %v1156
      %v1159 = vunpack.c.h.b16 %v1156
      %v1160 = vpack.c.b16 %v1158, %v1158
      %v1161 = vpack.c.b16 %v1159, %v1159
      %v1163 = vpack.i.b16 %v1160, %v1160
      %v1165 = vlaneseq
      %v1166 = vshrl.u32 %v1165, 7
      %v1167 = vsub.s32 1, %v1166
      %v1168 = vrot.slane %v1163, %v1167
      %v1170 = vpack.i.b16 %v1161, %v1161
      %v1172 = vlaneseq
      %v1173 = vshrl.u32 %v1172, 7
      %v1174 = vsub.s32 1, %v1173
      %v1175 = vrot.slane %v1170, %v1174
      %v1176 = vmul.bf16 %v451, %v1168
      %v1177 = vmul.bf16 %v456, %v1175
      %v1178 = vshrl.u32 %v1160, 16
      %v1179 = vpack.i.b16 %v1178, %v1178
      %v1181 = vlaneseq
      %v1182 = vshrl.u32 %v1181, 7
      %v1183 = vsub.s32 1, %v1182
      %v1184 = vrot.slane %v1179, %v1183
      %v1185 = vshrl.u32 %v1161, 16
      %v1186 = vpack.i.b16 %v1185, %v1185
      %v1188 = vlaneseq
      %v1189 = vshrl.u32 %v1188, 7
      %v1190 = vsub.s32 1, %v1189
      %v1191 = vrot.slane %v1186, %v1190
      %v1192 = vmul.bf16 %v485, %v1184
      %v1193 = vmul.bf16 %v490, %v1191
      %v1194 = vld [vmem:[%s5 + $0x10] sm:$0x44]
      %v1196 = vunpack.c.l.b16 %v1194
      %v1197 = vunpack.c.h.b16 %v1194
      %v1198 = vpack.c.b16 %v1196, %v1196
      %v1199 = vpack.c.b16 %v1197, %v1197
      %v1201 = vpack.i.b16 %v1198, %v1198
      %v1203 = vlaneseq
      %v1204 = vshrl.u32 %v1203, 7
      %v1205 = vsub.s32 2, %v1204
      %v1206 = vrot.slane %v1201, %v1205
      %v1208 = vpack.i.b16 %v1199, %v1199
      %v1210 = vlaneseq
      %v1211 = vshrl.u32 %v1210, 7
      %v1212 = vsub.s32 2, %v1211
      %v1213 = vrot.slane %v1208, %v1212
      %v1214 = vmul.bf16 %v513, %v1206
      %v1215 = vmul.bf16 %v518, %v1213
      %v1216 = vshrl.u32 %v1198, 16
      %v1217 = vpack.i.b16 %v1216, %v1216
      %v1219 = vlaneseq
      %v1220 = vshrl.u32 %v1219, 7
      %v1221 = vsub.s32 2, %v1220
      %v1222 = vrot.slane %v1217, %v1221
      %v1223 = vshrl.u32 %v1199, 16
      %v1224 = vpack.i.b16 %v1223, %v1223
      %v1226 = vlaneseq
      %v1227 = vshrl.u32 %v1226, 7
      %v1228 = vsub.s32 2, %v1227
      %v1229 = vrot.slane %v1224, %v1228
      %v1230 = vmul.bf16 %v547, %v1222
      %v1231 = vmul.bf16 %v552, %v1229
      %v1232 = vld [vmem:[%s5 + $0x10] sm:$0x88]
      %v1234 = vunpack.c.l.b16 %v1232
      %v1235 = vunpack.c.h.b16 %v1232
      %v1236 = vpack.c.b16 %v1234, %v1234
      %v1237 = vpack.c.b16 %v1235, %v1235
      %v1239 = vpack.i.b16 %v1236, %v1236
      %v1241 = vlaneseq
      %v1242 = vshrl.u32 %v1241, 7
      %v1243 = vsub.s32 3, %v1242
      %v1244 = vrot.slane %v1239, %v1243
      %v1246 = vpack.i.b16 %v1237, %v1237
      %v1248 = vlaneseq
      %v1249 = vshrl.u32 %v1248, 7
      %v1250 = vsub.s32 3, %v1249
      %v1251 = vrot.slane %v1246, %v1250
      %v1252 = vmul.bf16 %v575, %v1244
      %v1253 = vmul.bf16 %v580, %v1251
      %v1254 = vshrl.u32 %v1236, 16
      %v1255 = vpack.i.b16 %v1254, %v1254
      %v1257 = vlaneseq
      %v1258 = vshrl.u32 %v1257, 7
      %v1259 = vsub.s32 3, %v1258
      %v1260 = vrot.slane %v1255, %v1259
      %v1261 = vshrl.u32 %v1237, 16
      %v1262 = vpack.i.b16 %v1261, %v1261
      %v1264 = vlaneseq
      %v1265 = vshrl.u32 %v1264, 7
      %v1266 = vsub.s32 3, %v1265
      %v1267 = vrot.slane %v1262, %v1266
      %v1268 = vmul.bf16 %v609, %v1260
      %v1269 = vmul.bf16 %v614, %v1267
      %v1270 = vld [vmem:[%s5 + $0x18] sm:$0x11]
      %v1272 = vunpack.c.l.b16 %v1270
      %v1273 = vunpack.c.h.b16 %v1270
      %v1274 = vpack.c.b16 %v1272, %v1272
      %v1275 = vpack.c.b16 %v1273, %v1273
      %v1277 = vpack.i.b16 %v1274, %v1274
      %v1279 = vlaneseq
      %v1280 = vshrl.u32 %v1279, 7
      %v1281 = vsub.s32 0, %v1280
      %v1282 = vrot.slane %v1277, %v1281
      %v1284 = vpack.i.b16 %v1275, %v1275
      %v1286 = vlaneseq
      %v1287 = vshrl.u32 %v1286, 7
      %v1288 = vsub.s32 0, %v1287
      %v1289 = vrot.slane %v1284, %v1288
      %v1290 = vmul.bf16 %v637, %v1282
      %v1291 = vmul.bf16 %v642, %v1289
      %v1292 = vshrl.u32 %v1274, 16
      %v1293 = vpack.i.b16 %v1292, %v1292
      %v1295 = vlaneseq
      %v1296 = vshrl.u32 %v1295, 7
      %v1297 = vsub.s32 0, %v1296
      %v1298 = vrot.slane %v1293, %v1297
      %v1299 = vshrl.u32 %v1275, 16
      %v1300 = vpack.i.b16 %v1299, %v1299
      %v1302 = vlaneseq
      %v1303 = vshrl.u32 %v1302, 7
      %v1304 = vsub.s32 0, %v1303
      %v1305 = vrot.slane %v1300, %v1304
      %v1306 = vmul.bf16 %v671, %v1298
      %v1307 = vmul.bf16 %v676, %v1305
      %v1308 = vld [vmem:[%s5 + $0x18] sm:$0x22]
      %v1310 = vunpack.c.l.b16 %v1308
      %v1311 = vunpack.c.h.b16 %v1308
      %v1312 = vpack.c.b16 %v1310, %v1310
      %v1313 = vpack.c.b16 %v1311, %v1311
      %v1315 = vpack.i.b16 %v1312, %v1312
      %v1317 = vlaneseq
      %v1318 = vshrl.u32 %v1317, 7
      %v1319 = vsub.s32 1, %v1318
      %v1320 = vrot.slane %v1315, %v1319
      %v1322 = vpack.i.b16 %v1313, %v1313
      %v1324 = vlaneseq
      %v1325 = vshrl.u32 %v1324, 7
      %v1326 = vsub.s32 1, %v1325
      %v1327 = vrot.slane %v1322, %v1326
      %v1328 = vmul.bf16 %v699, %v1320
      %v1329 = vmul.bf16 %v704, %v1327
      %s1330 = scalar_lea.vmem %s3, 64
      %v1331 = vld [vmem:[%s1330] sm:$0xff]
      %v1332 = vld [vmem:[%s1330 + $0x8] sm:$0xff]
      %v1333 = vld [vmem:[%s1330 + $0x10] sm:$0xff]
      %v1334 = vld [vmem:[%s1330 + $0x18] sm:$0xff]
      %v1339 = vunpack.c.l.b16 %v1331
      %v1340 = vunpack.c.h.b16 %v1331
      %v1341 = vunpack.c.l.b16 %v1332
      %v1342 = vunpack.c.h.b16 %v1332
      %v1343 = vunpack.c.l.b16 %v1333
      %v1344 = vunpack.c.h.b16 %v1333
      %v1345 = vunpack.c.l.b16 %v1334
      %v1346 = vunpack.c.h.b16 %v1334
      %v1347 = vpack.c.b16 %v1341, %v1339
      %v1348 = vpack.c.b16 %v1342, %v1340
      %v1349 = vpack.c.b16 %v1345, %v1343
      %v1350 = vpack.c.b16 %v1346, %v1344
      %v1354 = vsel %vm1019, %v1348, 0
      %v1357 = vsel %vm1019, %v1350, 0
      %1359 = vmatprep.subr.bf16.mxu0 %v1307
      %1360 = vmatpush1.bf16.msra.mxu0 %v1306
      %1361 = vmatprep.subr.bf16.mxu0 %v1291
      %1362 = vmatpush1.bf16.msra.mxu0 %v1290
      %1363 = vmatprep.subr.bf16.mxu0 %v1269
      %1364 = vmatpush1.bf16.msra.mxu0 %v1268
      %1365 = vmatprep.subr.bf16.mxu0 %v1253
      %1366 = vmatpush1.bf16.msra.mxu0 %v1252
      %1367 = vmatprep.subr.bf16.mxu0 %v1231
      %1368 = vmatpush1.bf16.msra.mxu0 %v1230
      %1369 = vmatprep.subr.bf16.mxu0 %v1215
      %1370 = vmatpush1.bf16.msra.mxu0 %v1214
      %1371 = vmatprep.subr.bf16.mxu0 %v1193
      %1372 = vmatpush1.bf16.msra.mxu0 %v1192
      %1373 = vmatprep.subr.bf16.mxu0 %v1177
      %1374 = vmatpush1.bf16.msra.mxu0 %v1176
      %1375 = vmatprep.subr.bf16.mxu0 0
      %1376 = vmatpush2.bf16.msra.mxu0 0
      %1377 = vmatprep.subr.bf16.mxu0 0
      %1378 = vmatpush2.bf16.msra.mxu0 0
      %1379 = vmatprep.subr.bf16.mxu0 0
      %1380 = vmatpush2.bf16.msra.mxu0 0
      %1381 = vmatprep.subr.bf16.mxu0 0
      %1382 = vmatpush2.bf16.msra.mxu0 0
      %1383 = vmatprep.subr.bf16.mxu0 0
      %1384 = vmatpush2.bf16.msra.mxu0 0
      %1385 = vmatprep.subr.bf16.mxu0 0
      %1386 = vmatpush2.bf16.msra.mxu0 0
      %1387 = vmatprep.subr.bf16.mxu0 0
      %1388 = vmatpush2.bf16.msra.mxu0 0
      %1389 = vmatprep.subr.bf16.mxu0 %v1329
      %1390 = vmatpush2.bf16.msra.mxu0 %v1328
      %1391 = vmatprep.mubr.bf16.mxu0 %v1354
      %1392 = vmatmul.mubr.bf16.gmra.mxu0 %v1347
      %v1393 = vpop.f32.mrf.mxu0
      %v1394 = vadd.f32 0.0, %v1393
      %v1395 = vpop.f32.mrf.mxu0
      %v1396 = vadd.f32 0.0, %v1395
      %v1397 = vpop.f32.mrf.mxu0
      %v1398 = vadd.f32 0.0, %v1397
      %v1399 = vpop.f32.mrf.mxu0
      %v1400 = vadd.f32 0.0, %v1399
      %1401 = vmatprep.mubr.bf16.mxu0 %v1357
      %1402 = vmatmul.mubr.bf16.gmra.mxu0 %v1349
      %v1403 = vpop.f32.mrf.mxu0
      %v1404 = vadd.f32 0.0, %v1403
      %v1405 = vpop.f32.mrf.mxu0
      %v1406 = vadd.f32 0.0, %v1405
      %v1407 = vpop.f32.mrf.mxu0
      %v1408 = vadd.f32 0.0, %v1407
      %v1409 = vpop.f32.mrf.mxu0
      %v1410 = vadd.f32 0.0, %v1409
      %1411 = vdwg.mxu0
      %v1412 = vadd.f32 %v1138, %v1394
      %v1413 = vadd.f32 %v1140, %v1396
      %v1414 = vadd.f32 %v1142, %v1398
      %v1415 = vadd.f32 %v1144, %v1400
      %v1416 = vadd.f32 %v1148, %v1404
      %v1417 = vadd.f32 %v1150, %v1406
      %v1418 = vadd.f32 %v1152, %v1408
      %v1419 = vadd.f32 %v1154, %v1410
      %v1420 = vld [vmem:[%s4] sm:$0xff]
      %v1421 = vld [vmem:[%s4 + $0x8] sm:$0xff]
      %v1422 = vld [vmem:[%s4 + $0x10] sm:$0xff]
      %v1423 = vld [vmem:[%s4 + $0x18] sm:$0xff]
      %1425 = vset.pattern.permute.xlu0 0
      %1426 = vperm.xlu0 %1425, %v1420
      %v1427 = vpop.permute.xlu0 %1426
      %1430 = vset.pattern.permute.xlu0 0
      %1431 = vperm.xlu0 %1430, %v1421
      %v1432 = vpop.permute.xlu0 %1431
      %1435 = vset.pattern.permute.xlu0 0
      %1436 = vperm.xlu0 %1435, %v1422
      %v1437 = vpop.permute.xlu0 %1436
      %1440 = vset.pattern.permute.xlu0 0
      %1441 = vperm.xlu0 %1440, %v1423
      %v1442 = vpop.permute.xlu0 %1441
      %v1444 = vadd.f32 %v1412, %v1427
      %v1445 = vadd.f32 %v1413, %v1427
      %v1446 = vadd.f32 %v1414, %v1432
      %v1447 = vadd.f32 %v1415, %v1432
      %v1448 = vadd.f32 %v1416, %v1437
      %v1449 = vadd.f32 %v1417, %v1437
      %v1450 = vadd.f32 %v1418, %v1442
      %v1451 = vadd.f32 %v1419, %v1442
      %1452 = vst [vmem:[%s251] sm:$0xff] %v1444
      %1453 = vst [vmem:[%s251 + $0x8] sm:$0xff] %v1445
      %1454 = vst [vmem:[%s251 + $0x10] sm:$0xff] %v1446
      %1455 = vst [vmem:[%s251 + $0x18] sm:$0xff] %v1447
      %1456 = vst [vmem:[%s251 + $0x20] sm:$0xff] %v1448
      %1457 = vst [vmem:[%s251 + $0x28] sm:$0xff] %v1449
      %1458 = vst [vmem:[%s251 + $0x30] sm:$0xff] %v1450
      %1459 = vst [vmem:[%s251 + $0x38] sm:$0xff] %v1451
      %p1460 = scmp.lt.s32.totalorder %s17, 1
      %s1461 = scalar_select %p1460, %s17, 1
      %s1462 = smul.addr %s1461, 8
      %s1463 = smul.addr %s1462, 8
      %s1464 = scalar_lea.vmem %s6, %s1463
      // Predicated region
      $region45: #{block_forward.1} parent=43 // pred_check
        %p1465 = pneg %p166
      $region46: #{block_forward.1} parent=43 // pred_check_branch
        %1467 = sbr.rel (%p1465) target = $region48
      $region47: #{block_forward.1} parent=43 // pred_region
        _
      $region48: #{block_forward.1} parent=43 // pred_fallthru
        _
    $region44: #{block_forward.1} parent=5 // pred_fallthru
      _
    %p1468 = scmp.le.s32.totalorder 2, %s12
    // Predicated region
    $region49: #{block_forward.1} parent=5 // pred_check
      %p1469 = pneg %p1468
    $region50: #{block_forward.1} parent=5 // pred_check_branch
      %1471 = sbr.rel (%p1469) target = $region52
    $region51: #{block_forward.1} parent=5 // pred_region
      %s1472 = ssub.s32 %s12, 2
      // Predicated region
      $region53: #{block_forward.1} parent=51 // pred_check
        %p1473 = pneg %p172
      $region54: #{block_forward.1} parent=51 // pred_check_branch
        %1475 = sbr.rel (%p1473) target = $region56
      $region55: #{block_forward.1} parent=51 // pred_region
        %p1476 = scmp.lt.s32.totalorder %s18, 1
        %s1477 = scalar_select %p1476, %s18, 1
        %s1478 = smul.addr %s1477, 8
        %s1479 = smul.addr %s1478, 8
        %s1480 = scalar_lea.vmem %s6, %s1479
      $region56: #{block_forward.1} parent=51 // pred_fallthru
        _
    $region52: #{block_forward.1} parent=5 // pred_fallthru
      _
  $region6: #{block_forward.1} parent=0 // loop_footer
    %s16 = sadd.s32 1, %s12
  $region7: #{block_forward.1} parent=0 // loop_footer_branch
    %11 = sbr.rel target = $region3
  $region8: #{block_forward.1} parent=0 // loop_exit
    _

</llo_original>
